<compile_context>
chip_gen: v5e
topology: v5e:2x2
jax: 0.10.0
libtpu: 0.0.40
codegen_flags: <defaults>
</compile_context>

<pallas_src>
import jax
import jax.numpy as jnp
from jax.experimental import pallas as pl
from jax.experimental.pallas import tpu as pltpu


def _convlstm_kernel(p_ref, c_ref, w_ref, b_ref, wc_ref, ch_ref, cc_ref):
    # p_ref  : (1, Kc_pad, Mb) bf16   im2col patches, contraction-major
    # c_ref  : (1, Ch, Mb)    f32     cell state (NCHW flattened over H*W)
    # w_ref  : (4*Ch, Kc_pad) bf16    fused conv weights, gate order i,f,c,o
    # b_ref  : (4*Ch, 1)      f32     fused biases (x-path convs)
    # wc_ref : (3*Ch, Mb)     f32     merged peephole weights [Wci; Wcf; Wco]
    # ch_ref, cc_ref : (1, Ch, Mb)    outputs (new hidden / new cell)
    Ch = c_ref.shape[1]

    # Single deep-contraction matmul on the MXU: bf16 operands, f32 accum.
    acc = jnp.dot(w_ref[...], p_ref[0],
                  preferred_element_type=jnp.float32)        # (4*Ch, Mb) f32
    acc = acc + b_ref[...]                                   # bias epilogue

    # Gate slices: sublane slices at multiples of 8, full lane width.
    xi = acc[0 * Ch:1 * Ch]
    xf = acc[1 * Ch:2 * Ch]
    xg = acc[2 * Ch:3 * Ch]
    xo = acc[3 * Ch:4 * Ch]

    c = c_ref[0]
    wci = wc_ref[0 * Ch:1 * Ch]
    wcf = wc_ref[1 * Ch:2 * Ch]
    wco = wc_ref[2 * Ch:3 * Ch]

    # Peephole-LSTM gate math, kept in f32 on the VPU/EUP, lane-dense.
    ci = jax.nn.sigmoid(xi + c * wci)
    cf = jax.nn.sigmoid(xf + c * wcf)
    cc = cf * c + ci * jnp.tanh(xg)
    co = jax.nn.sigmoid(xo + cc * wco)
    ch = co * jnp.tanh(cc)

    ch_ref[0] = ch.astype(ch_ref.dtype)
    cc_ref[0] = cc.astype(cc_ref.dtype)


def conv_lstm_cell(x, h, c, wx, wh, b, wci, wcf, wco, kernel_size):
    """ConvLSTM cell forward.

    x: (B, Cin, H, W); h, c: (B, Ch, H, W)      -- NCHW, like the PyTorch module
    wx: (4*Ch, Cin, K, K), wh: (4*Ch, Ch, K, K) -- OIHW, gate order [i, f, c, o]
    b:  (4*Ch,)                                 -- x-path conv biases
    wci, wcf, wco: (Ch, H, W)                   -- peephole weights
    Returns (ch, cc) in NCHW; ch has x.dtype, cc is float32.
    """
    B, Cin, H, W = x.shape
    Ch = h.shape[1]
    K = kernel_size
    p = (K - 1) // 2
    C = Cin + Ch
    M = H * W

    # ---- wrapper-side im2col (fused x/h conv) -------------------------------
    xh = jnp.concatenate([x, h], axis=1).astype(jnp.bfloat16)      # (B,C,H,W)
    xhp = jnp.pad(xh, ((0, 0), (0, 0), (p, p), (p, p)))
    cols = [xhp[:, :, dy:dy + H, dx:dx + W]
            for dy in range(K) for dx in range(K)]                 # (dy,dx,c)
    patches = jnp.concatenate(cols, axis=1).reshape(B, K * K * C, M)

    Kc = K * K * C
    Kc_pad = ((Kc + 127) // 128) * 128          # 324 -> 384: MXU-aligned depth
    if Kc_pad != Kc:
        patches = jnp.pad(patches, ((0, 0), (0, Kc_pad - Kc), (0, 0)))

    # Fused weights: (4Ch, C, K, K) -> (4Ch, K, K, C) -> (4Ch, Kc) -> pad.
    wxh = jnp.concatenate([wx, wh], axis=1)
    wmat = wxh.transpose(0, 2, 3, 1).reshape(4 * Ch, Kc)
    if Kc_pad != Kc:
        wmat = jnp.pad(wmat, ((0, 0), (0, Kc_pad - Kc)))
    wmat = wmat.astype(jnp.bfloat16)

    b2 = b.reshape(4 * Ch, 1).astype(jnp.float32)
    c2 = c.reshape(B, Ch, M).astype(jnp.float32)
    wc = jnp.concatenate([wci, wcf, wco], axis=0).reshape(3 * Ch, M)
    wc = wc.astype(jnp.float32)

    # ---- grid: one step per batch; split M only when B == 1 (2 TCs on v7x) -
    nmb = 1
    if B == 1 and M % 256 == 0:
        nmb = 2
    Mb = M // nmb

    out_shape = (jax.ShapeDtypeStruct((B, Ch, M), x.dtype),
                 jax.ShapeDtypeStruct((B, Ch, M), jnp.float32))  # cc pinned f32

    state_blk = pl.BlockSpec((1, Ch, Mb), lambda bi, mi: (bi, 0, mi))

    ch, cc = pl.pallas_call(
        _convlstm_kernel,
        out_shape=out_shape,
        grid=(B, nmb),
        in_specs=[
            pl.BlockSpec((1, Kc_pad, Mb), lambda bi, mi: (bi, 0, mi)),
            state_blk,                                          # cell state
            pl.BlockSpec((4 * Ch, Kc_pad), lambda bi, mi: (0, 0)),  # weights
            pl.BlockSpec((4 * Ch, 1), lambda bi, mi: (0, 0)),       # bias
            pl.BlockSpec((3 * Ch, Mb), lambda bi, mi: (0, mi)),     # peepholes
        ],
        out_specs=(state_blk, state_blk),
        compiler_params=pltpu.CompilerParams(
            dimension_semantics=("parallel", "parallel"),
            vmem_limit_bytes=32 * 1024 * 1024),
    )(patches, c2, wmat, b2, wc)

    return ch.reshape(B, Ch, H, W), cc.reshape(B, Ch, H, W)


def ref_conv_lstm_cell(x, h, c, wx, wh, b, wci, wcf, wco,
                       matmul_dtype=jnp.float32):
    """Pure-JAX reference (NCHW / OIHW) mirroring the PyTorch forward.

    matmul_dtype=float32  -> exact (Precision.HIGHEST) reference.
    matmul_dtype=bfloat16 -> matches the kernel's MXU numerics (f32 accum).
    """
    exact = jnp.dtype(matmul_dtype) == jnp.dtype(jnp.float32)
    prec = jax.lax.Precision.HIGHEST if exact else jax.lax.Precision.DEFAULT
    dn = ('NCHW', 'OIHW', 'NCHW')
    xd, hd = x.astype(matmul_dtype), h.astype(matmul_dtype)
    wxd, whd = wx.astype(matmul_dtype), wh.astype(matmul_dtype)
    gx = jax.lax.conv_general_dilated(xd, wxd, (1, 1), 'SAME',
                                      dimension_numbers=dn, precision=prec,
                                      preferred_element_type=jnp.float32)
    gh = jax.lax.conv_general_dilated(hd, whd, (1, 1), 'SAME',
                                      dimension_numbers=dn, precision=prec,
                                      preferred_element_type=jnp.float32)
    g = gx + gh + b.reshape(1, -1, 1, 1)
    Ch = h.shape[1]
    xi, xf = g[:, 0:Ch], g[:, Ch:2 * Ch]
    xg, xo = g[:, 2 * Ch:3 * Ch], g[:, 3 * Ch:4 * Ch]
    ci = jax.nn.sigmoid(xi + c * wci[None])
    cf = jax.nn.sigmoid(xf + c * wcf[None])
    cc = cf * c + ci * jnp.tanh(xg)
    co = jax.nn.sigmoid(xo + cc * wco[None])
    ch = co * jnp.tanh(cc)
    return ch, cc


if __name__ == "__main__":
    B, Cin, Ch, H, W, K = 2, 4, 32, 16, 16, 3
    key = jax.random.PRNGKey(0)
    ks = jax.random.split(key, 16)

    # Per-gate conv weights mirroring the module's 8 separate Conv2d layers
    # (OIHW); x-path convs have biases, h-path convs do not.
    wxi = jax.random.normal(ks[0], (Ch, Cin, K, K), jnp.float32) * 0.1
    whi = jax.random.normal(ks[1], (Ch, Ch, K, K), jnp.float32) * 0.1
    wxf = jax.random.normal(ks[2], (Ch, Cin, K, K), jnp.float32) * 0.1
    whf = jax.random.normal(ks[3], (Ch, Ch, K, K), jnp.float32) * 0.1
    wxc = jax.random.normal(ks[4], (Ch, Cin, K, K), jnp.float32) * 0.1
    whc = jax.random.normal(ks[5], (Ch, Ch, K, K), jnp.float32) * 0.1
    wxo = jax.random.normal(ks[6], (Ch, Cin, K, K), jnp.float32) * 0.1
    who = jax.random.normal(ks[7], (Ch, Ch, K, K), jnp.float32) * 0.1
    b_i = jax.random.normal(ks[8], (Ch,), jnp.float32) * 0.1
    b_f = jax.random.normal(ks[9], (Ch,), jnp.float32) * 0.1
    b_c = jax.random.normal(ks[10], (Ch,), jnp.float32) * 0.1
    b_o = jax.random.normal(ks[11], (Ch,), jnp.float32) * 0.1

    # Fused gate order [i, f, c, o].
    wx = jnp.concatenate([wxi, wxf, wxc, wxo], axis=0)   # (4Ch, Cin, K, K)
    wh = jnp.concatenate([whi, whf, whc, who], axis=0)   # (4Ch, Ch, K, K)
    b = jnp.concatenate([b_i, b_f, b_c, b_o], axis=0)    # (4Ch,)

    # Peephole weights (module's init_hidden makes them zeros; nonzero here
    # so the peephole path is exercised).
    wci = jax.random.normal(ks[12], (Ch, H, W), jnp.float32) * 0.1
    wcf = jax.random.normal(ks[13], (Ch, H, W), jnp.float32) * 0.1
    wco = jax.random.normal(ks[14], (Ch, H, W), jnp.float32) * 0.1

    # Inputs (NCHW, matching the PyTorch module).
    kx = jax.random.split(ks[15], 3)
    x = jax.random.normal(kx[0], (B, Cin, H, W), jnp.float32)
    h = jax.random.normal(kx[1], (B, Ch, H, W), jnp.float32)
    c = jax.random.normal(kx[2], (B, Ch, H, W), jnp.float32)

    fwd = jax.jit(lambda x_, h_, c_: conv_lstm_cell(
        x_, h_, c_, wx, wh, b, wci, wcf, wco, K))
    ch_k, cc_k = fwd(x, h, c)
    jax.block_until_ready((ch_k, cc_k))

    # Tight check vs. a reference with the same bf16-operand / f32-accum MXU
    # numerics, plus a loose sanity check vs. the f32 HIGHEST reference
    # (bf16 MXU operands necessarily diverge slightly from full f32 — this is
    # the documented tolerance contract of this kernel).
    ch_b, cc_b = ref_conv_lstm_cell(x, h, c, wx, wh, b, wci, wcf, wco,
                                    matmul_dtype=jnp.bfloat16)
    ch_f, cc_f = ref_conv_lstm_cell(x, h, c, wx, wh, b, wci, wcf, wco,
                                    matmul_dtype=jnp.float32)

    assert jnp.allclose(ch_k, ch_b, atol=2e-3, rtol=2e-3), "ch mismatch (bf16 ref)"
    assert jnp.allclose(cc_k, cc_b, atol=2e-3, rtol=2e-3), "cc mismatch (bf16 ref)"
    assert jnp.allclose(ch_k, ch_f, atol=1e-1, rtol=1e-1), "ch drift vs f32 ref"
    assert jnp.allclose(cc_k, cc_f, atol=1e-1, rtol=1e-1), "cc drift vs f32 ref"

    print("KERNEL_OK")
</pallas_src>

<mosaic_0001>
module attributes {stable_mosaic.version = 11 : i64} {
  func.func @_convlstm_kernel(%arg0: i32, %arg1: i32, %arg2: memref<1x384x256xbf16, #tpu.memory_space<vmem>>, %arg3: memref<1x32x256xf32, #tpu.memory_space<vmem>>, %arg4: memref<128x384xbf16, #tpu.memory_space<vmem>>, %arg5: memref<128x1xf32, #tpu.memory_space<vmem>>, %arg6: memref<96x256xf32, #tpu.memory_space<vmem>>, %arg7: memref<1x32x256xf32, #tpu.memory_space<vmem>>, %arg8: memref<1x32x256xf32, #tpu.memory_space<vmem>>) attributes {dimension_semantics = [#tpu.dimension_semantics<parallel>, #tpu.dimension_semantics<parallel>], iteration_bounds = array<i64: 2, 1>, scalar_prefetch = 0 : i64, scratch_operands = 0 : i64, tpu.core_type = #tpu.core_type<tc>, window_params = [{transform_indices = @transform_0, window_bounds = array<i64: 1, 384, 256>}, {transform_indices = @transform_1, window_bounds = array<i64: 1, 32, 256>}, {pipeline_mode = #tpu.pipeline_mode<synchronous>, transform_indices = @transform_2, window_bounds = array<i64: 128, 384>}, {pipeline_mode = #tpu.pipeline_mode<synchronous>, transform_indices = @transform_3, window_bounds = array<i64: 128, 1>}, {transform_indices = @transform_4, window_bounds = array<i64: 96, 256>}, {transform_indices = @transform_5, window_bounds = array<i64: 1, 32, 256>}, {transform_indices = @transform_6, window_bounds = array<i64: 1, 32, 256>}]} {
    %c0 = arith.constant 0 : index
    %c0_0 = arith.constant 0 : index
    %0 = vector.load %arg4[%c0, %c0_0] : memref<128x384xbf16, #tpu.memory_space<vmem>>, vector<128x384xbf16>
    %c0_1 = arith.constant 0 : index
    %c0_2 = arith.constant 0 : index
    %c0_3 = arith.constant 0 : index
    %1 = vector.load %arg2[%c0_1, %c0_2, %c0_3] : memref<1x384x256xbf16, #tpu.memory_space<vmem>>, vector<1x384x256xbf16>
    %2 = vector.shape_cast %1 : vector<1x384x256xbf16> to vector<384x256xbf16>
    %cst = arith.constant dense<0.000000e+00> : vector<128x256xf32>
    %3 = tpu.matmul %0, %2, %cst {dimension_numbers = #tpu.dot_dimension_numbers<[1], [0], [0], [1], [0, 0, 1, 1], [], []>} : vector<128x384xbf16>, vector<384x256xbf16>, vector<128x256xf32> -> vector<128x256xf32>
    %c0_4 = arith.constant 0 : index
    %c0_5 = arith.constant 0 : index
    %4 = vector.load %arg5[%c0_4, %c0_5] : memref<128x1xf32, #tpu.memory_space<vmem>>, vector<128x1xf32>
    %5 = vector.broadcast %4 : vector<128x1xf32> to vector<128x256xf32>
    %6 = arith.addf %3, %5 : vector<128x256xf32>
    %7 = vector.extract_strided_slice %6 {offsets = [0, 0], sizes = [32, 256], strides = [1, 1]} : vector<128x256xf32> to vector<32x256xf32>
    %8 = vector.extract_strided_slice %6 {offsets = [32, 0], sizes = [32, 256], strides = [1, 1]} : vector<128x256xf32> to vector<32x256xf32>
    %9 = vector.extract_strided_slice %6 {offsets = [64, 0], sizes = [32, 256], strides = [1, 1]} : vector<128x256xf32> to vector<32x256xf32>
    %10 = vector.extract_strided_slice %6 {offsets = [96, 0], sizes = [32, 256], strides = [1, 1]} : vector<128x256xf32> to vector<32x256xf32>
    %c0_6 = arith.constant 0 : index
    %c0_7 = arith.constant 0 : index
    %c0_8 = arith.constant 0 : index
    %11 = vector.load %arg3[%c0_6, %c0_7, %c0_8] : memref<1x32x256xf32, #tpu.memory_space<vmem>>, vector<1x32x256xf32>
    %12 = vector.shape_cast %11 : vector<1x32x256xf32> to vector<32x256xf32>
    %c0_9 = arith.constant 0 : index
    %c0_10 = arith.constant 0 : index
    %13 = vector.load %arg6[%c0_9, %c0_10] : memref<96x256xf32, #tpu.memory_space<vmem>>, vector<32x256xf32>
    %c32 = arith.constant 32 : index
    %c0_11 = arith.constant 0 : index
    %14 = vector.load %arg6[%c32, %c0_11] : memref<96x256xf32, #tpu.memory_space<vmem>>, vector<32x256xf32>
    %c64 = arith.constant 64 : index
    %c0_12 = arith.constant 0 : index
    %15 = vector.load %arg6[%c64, %c0_12] : memref<96x256xf32, #tpu.memory_space<vmem>>, vector<32x256xf32>
    %16 = arith.mulf %12, %13 : vector<32x256xf32>
    %17 = arith.addf %7, %16 : vector<32x256xf32>
    %18 = arith.negf %17 : vector<32x256xf32>
    %19 = math.exp %18 : vector<32x256xf32>
    %cst_13 = arith.constant 1.000000e+00 : f32
    %20 = vector.broadcast %cst_13 : f32 to vector<32x256xf32>
    %21 = arith.addf %20, %19 : vector<32x256xf32>
    %22 = arith.divf %20, %21 : vector<32x256xf32>
    %23 = arith.mulf %12, %14 : vector<32x256xf32>
    %24 = arith.addf %8, %23 : vector<32x256xf32>
    %25 = arith.negf %24 : vector<32x256xf32>
    %26 = math.exp %25 : vector<32x256xf32>
    %cst_14 = arith.constant 1.000000e+00 : f32
    %27 = vector.broadcast %cst_14 : f32 to vector<32x256xf32>
    %28 = arith.addf %27, %26 : vector<32x256xf32>
    %29 = arith.divf %27, %28 : vector<32x256xf32>
    %30 = arith.mulf %29, %12 : vector<32x256xf32>
    %31 = math.tanh %9 : vector<32x256xf32>
    %32 = arith.mulf %22, %31 : vector<32x256xf32>
    %33 = arith.addf %30, %32 : vector<32x256xf32>
    %34 = arith.mulf %33, %15 : vector<32x256xf32>
    %35 = arith.addf %10, %34 : vector<32x256xf32>
    %36 = arith.negf %35 : vector<32x256xf32>
    %37 = math.exp %36 : vector<32x256xf32>
    %cst_15 = arith.constant 1.000000e+00 : f32
    %38 = vector.broadcast %cst_15 : f32 to vector<32x256xf32>
    %39 = arith.addf %38, %37 : vector<32x256xf32>
    %40 = arith.divf %38, %39 : vector<32x256xf32>
    %41 = math.tanh %33 : vector<32x256xf32>
    %42 = arith.mulf %40, %41 : vector<32x256xf32>
    %c0_16 = arith.constant 0 : index
    %c0_17 = arith.constant 0 : index
    %c0_18 = arith.constant 0 : index
    %43 = vector.load %arg7[%c0_16, %c0_17, %c0_18] : memref<1x32x256xf32, #tpu.memory_space<vmem>>, vector<1x32x256xf32>
    %44 = vector.shape_cast %43 : vector<1x32x256xf32> to vector<32x256xf32>
    %45 = vector.shape_cast %42 : vector<32x256xf32> to vector<1x32x256xf32>
    tpu.vector_store %arg7[%c0_16, %c0_17, %c0_18], %45 {strides = array<i32>} : memref<1x32x256xf32, #tpu.memory_space<vmem>>, vector<1x32x256xf32>,
    %c0_19 = arith.constant 0 : index
    %c0_20 = arith.constant 0 : index
    %c0_21 = arith.constant 0 : index
    %46 = vector.load %arg8[%c0_19, %c0_20, %c0_21] : memref<1x32x256xf32, #tpu.memory_space<vmem>>, vector<1x32x256xf32>
    %47 = vector.shape_cast %46 : vector<1x32x256xf32> to vector<32x256xf32>
    %48 = vector.shape_cast %33 : vector<32x256xf32> to vector<1x32x256xf32>
    tpu.vector_store %arg8[%c0_19, %c0_20, %c0_21], %48 {strides = array<i32>} : memref<1x32x256xf32, #tpu.memory_space<vmem>>, vector<1x32x256xf32>,
    return
  }
  func.func @transform_0(%arg0: i32, %arg1: i32) -> (i32, i32, i32) {
    %c0_i32 = arith.constant 0 : i32
    %c0_i32_0 = arith.constant 0 : i32
    return %arg0, %c0_i32, %arg1 : i32, i32, i32
  }
  func.func @transform_1(%arg0: i32, %arg1: i32) -> (i32, i32, i32) {
    %c0_i32 = arith.constant 0 : i32
    %c0_i32_0 = arith.constant 0 : i32
    return %arg0, %c0_i32, %arg1 : i32, i32, i32
  }
  func.func @transform_2(%arg0: i32, %arg1: i32) -> (i32, i32) {
    %c0_i32 = arith.constant 0 : i32
    %c0_i32_0 = arith.constant 0 : i32
    %c0_i32_1 = arith.constant 0 : i32
    return %c0_i32, %c0_i32_0 : i32, i32
  }
  func.func @transform_3(%arg0: i32, %arg1: i32) -> (i32, i32) {
    %c0_i32 = arith.constant 0 : i32
    %c0_i32_0 = arith.constant 0 : i32
    %c0_i32_1 = arith.constant 0 : i32
    return %c0_i32, %c0_i32_0 : i32, i32
  }
  func.func @transform_4(%arg0: i32, %arg1: i32) -> (i32, i32) {
    %c0_i32 = arith.constant 0 : i32
    %c0_i32_0 = arith.constant 0 : i32
    return %c0_i32, %arg1 : i32, i32
  }
  func.func @transform_5(%arg0: i32, %arg1: i32) -> (i32, i32, i32) {
    %c0_i32 = arith.constant 0 : i32
    %c0_i32_0 = arith.constant 0 : i32
    return %arg0, %c0_i32, %arg1 : i32, i32, i32
  }
  func.func @transform_6(%arg0: i32, %arg1: i32) -> (i32, i32, i32) {
    %c0_i32 = arith.constant 0 : i32
    %c0_i32_0 = arith.constant 0 : i32
    return %arg0, %c0_i32, %arg1 : i32, i32, i32
  }
}

</mosaic_0001>

<llo_original>
// kernel: _lambda_.1
$region0: #{_lambda_.1}
  #allocation0 [shape = 'u32[]', space=smem, size = 0x4, offset = 0x4, fixed_abs, tag = 'smem constant byte address 0x4 - core index']
  #allocation1 [shape = 'u32[72,128]{1,0:T(1,128)}', space=vmem, size = 0x9000, scoped, tag = 'internal scratch']
  %s0 = inlined_call_operand.vmem [shape: bf16[2,384,256], index: 0, kind: input, shape index: {}]
  %s1 = inlined_call_operand.vmem [shape: f32[2,32,256], index: 1, kind: input, shape index: {}]
  %s2 = inlined_call_operand.vmem [shape: bf16[128,384], index: 2, kind: input, shape index: {}]
  %s3 = inlined_call_operand.vmem [shape: f32[128,1], index: 3, kind: input, shape index: {}]
  %s4 = inlined_call_operand.vmem [shape: f32[96,256], index: 4, kind: input, shape index: {}]
  %s5 = inlined_call_operand.vmem [shape: f32[2,32,256], index: 5, kind: output, shape index: {0}]
  %s6 = inlined_call_operand.vmem [shape: f32[2,32,256], index: 6, kind: output, shape index: {1}]
  %7 = xla_tuple %s5, %s6
  %s8 = sld [smem:[#allocation0]]
  $region61: #{_lambda_.1} parent=0
    _
  %s10 = ssub.s32 1, %s8
  %s11 = scalar_select 0, %s10, %s8
  loop: start=0, step=1, limit=4
  $region2: #{_lambda_.1} parent=0 // loop_pre_header
    _
  $region3: #{_lambda_.1} parent=0 // loop_header
    %s13 = sphi 0, %s17
    %p14 = scmp.ge.s32.totalorder %s13, 4
    %s20 = sphi 0, %s32
    %s21 = sphi 0, %s28
    %s22 = sphi 0, %s20
    %s23 = sphi 0, %s21
    %s24 = sphi 0, %s22
    %s25 = sphi 0, %s23
    %s37 = sphi 0, %s39
    %s40 = sphi 0, %s37
    %s41 = sphi 0, %s40
    %s57 = sphi 0, %s41
    %s65 = sphi 0, %s67
    %s68 = sphi 0, %s65
    %s69 = sphi 0, %s68
    %s85 = sphi 0, %s69
    %s89 = sphi 0, %s89
    %s91 = sphi 0, %s89
    %s92 = sphi 0, %s91
    %s106 = sphi 0, %s92
    %s110 = sphi 0, %s110
    %s112 = sphi 0, %s110
    %s113 = sphi 0, %s112
    %s127 = sphi 0, %s113
    %s133 = sphi 0, %s135
    %s136 = sphi 0, %s133
    %s137 = sphi 0, %s136
    %s153 = sphi 0, %s137
    %s161 = sphi 0, %s163
    %s164 = sphi 0, %s161
    %s165 = sphi 0, %s164
    %s181 = sphi 0, %s165
    %s189 = sphi 0, %s191
    %s192 = sphi 0, %s189
    %s193 = sphi 0, %s192
    %s209 = sphi 0, %s193
  $region4: #{_lambda_.1} parent=0 // loop_header_branch
    %16 = sbr.rel (%p14) target = $region8
  $region5: #{_lambda_.1} parent=0 // loop_body
    %s18 = ssub.s32 %s13, 1
    %s19 = ssub.s32 %s13, 2
    %s26 = sadd.s32 1, %s21
    %p27 = scmp.ge.s32.totalorder %s26, 1
    %s28 = scalar_select %p27, 0, %s26
    %s29 = sadd.s32 1, %s20
    %s30 = scalar_select %p27, %s29, %s20
    %p31 = scmp.ge.s32.totalorder %s30, 2
    %s32 = scalar_select %p31, 0, %s30
    %s33 = ssub.s32 %s20, %s32
    %s34 = ssub.s32 %s21, %s28
    %s35 = sor.u32 %s33, %s34
    %p36 = scmp.eq.s32.totalorder %s35, 0
    %s38 = sadd.s32 %s37, 1
    %s39 = scalar_select %p36, %s37, %s38
    %p42 = pneg %p36
    %p43 = scmp.eq.s32.totalorder %s13, 1
    %p44 = por %p42, %p43
    %p45 = scmp.ne.s32.totalorder %s37, %s40
    %p46 = scmp.eq.s32.totalorder %s13, 0
    %p47 = por %p45, %p46
    %p48 = scmp.ne.s32.totalorder %s37, %s40
    %p49 = scmp.eq.s32.totalorder %s18, 1
    %p50 = por %p48, %p49
    %p51 = scmp.ne.s32.totalorder %s40, %s41
    %p52 = scmp.eq.s32.totalorder %s18, 0
    %p53 = por %p51, %p52
    %p54 = scmp.ne.s32.totalorder %s40, %s41
    %p55 = scmp.eq.s32.totalorder %s19, 1
    %p56 = por %p54, %p55
    %p58 = scmp.ne.s32.totalorder %s41, %s57
    %p59 = scmp.eq.s32.totalorder %s19, 0
    %p60 = por %p58, %p59
    %s61 = ssub.s32 %s20, %s32
    %s62 = ssub.s32 %s21, %s28
    %s63 = sor.u32 %s61, %s62
    %p64 = scmp.eq.s32.totalorder %s63, 0
    %s66 = sadd.s32 %s65, 1
    %s67 = scalar_select %p64, %s65, %s66
    %p70 = pneg %p64
    %p71 = scmp.eq.s32.totalorder %s13, 1
    %p72 = por %p70, %p71
    %p73 = scmp.ne.s32.totalorder %s65, %s68
    %p74 = scmp.eq.s32.totalorder %s13, 0
    %p75 = por %p73, %p74
    %p76 = scmp.ne.s32.totalorder %s65, %s68
    %p77 = scmp.eq.s32.totalorder %s18, 1
    %p78 = por %p76, %p77
    %p79 = scmp.ne.s32.totalorder %s68, %s69
    %p80 = scmp.eq.s32.totalorder %s18, 0
    %p81 = por %p79, %p80
    %p82 = scmp.ne.s32.totalorder %s68, %s69
    %p83 = scmp.eq.s32.totalorder %s19, 1
    %p84 = por %p82, %p83
    %p86 = scmp.ne.s32.totalorder %s69, %s85
    %p87 = scmp.eq.s32.totalorder %s19, 0
    %p88 = por %p86, %p87
    %s90 = sadd.s32 %s89, 1
    %p93 = scmp.eq.s32.totalorder %s13, 1
    %p94 = scmp.ne.s32.totalorder %s89, %s91
    %p95 = scmp.eq.s32.totalorder %s13, 0
    %p96 = por %p94, %p95
    %p97 = scmp.ne.s32.totalorder %s89, %s91
    %p98 = scmp.eq.s32.totalorder %s18, 1
    %p99 = por %p97, %p98
    %p100 = scmp.ne.s32.totalorder %s91, %s92
    %p101 = scmp.eq.s32.totalorder %s18, 0
    %p102 = por %p100, %p101
    %p103 = scmp.ne.s32.totalorder %s91, %s92
    %p104 = scmp.eq.s32.totalorder %s19, 1
    %p105 = por %p103, %p104
    %p107 = scmp.ne.s32.totalorder %s92, %s106
    %p108 = scmp.eq.s32.totalorder %s19, 0
    %p109 = por %p107, %p108
    %s111 = sadd.s32 %s110, 1
    %p114 = scmp.eq.s32.totalorder %s13, 1
    %p115 = scmp.ne.s32.totalorder %s110, %s112
    %p116 = scmp.eq.s32.totalorder %s13, 0
    %p117 = por %p115, %p116
    %p118 = scmp.ne.s32.totalorder %s110, %s112
    %p119 = scmp.eq.s32.totalorder %s18, 1
    %p120 = por %p118, %p119
    %p121 = scmp.ne.s32.totalorder %s112, %s113
    %p122 = scmp.eq.s32.totalorder %s18, 0
    %p123 = por %p121, %p122
    %p124 = scmp.ne.s32.totalorder %s112, %s113
    %p125 = scmp.eq.s32.totalorder %s19, 1
    %p126 = por %p124, %p125
    %p128 = scmp.ne.s32.totalorder %s113, %s127
    %p129 = scmp.eq.s32.totalorder %s19, 0
    %p130 = por %p128, %p129
    %s131 = ssub.s32 %s21, %s28
    %p132 = scmp.eq.s32.totalorder %s131, 0
    %s134 = sadd.s32 %s133, 1
    %s135 = scalar_select %p132, %s133, %s134
    %p138 = pneg %p132
    %p139 = scmp.eq.s32.totalorder %s13, 1
    %p140 = por %p138, %p139
    %p141 = scmp.ne.s32.totalorder %s133, %s136
    %p142 = scmp.eq.s32.totalorder %s13, 0
    %p143 = por %p141, %p142
    %p144 = scmp.ne.s32.totalorder %s133, %s136
    %p145 = scmp.eq.s32.totalorder %s18, 1
    %p146 = por %p144, %p145
    %p147 = scmp.ne.s32.totalorder %s136, %s137
    %p148 = scmp.eq.s32.totalorder %s18, 0
    %p149 = por %p147, %p148
    %p150 = scmp.ne.s32.totalorder %s136, %s137
    %p151 = scmp.eq.s32.totalorder %s19, 1
    %p152 = por %p150, %p151
    %p154 = scmp.ne.s32.totalorder %s137, %s153
    %p155 = scmp.eq.s32.totalorder %s19, 0
    %p156 = por %p154, %p155
    %s157 = ssub.s32 %s20, %s32
    %s158 = ssub.s32 %s21, %s28
    %s159 = sor.u32 %s157, %s158
    %p160 = scmp.eq.s32.totalorder %s159, 0
    %s162 = sadd.s32 %s161, 1
    %s163 = scalar_select %p160, %s161, %s162
    %p166 = pneg %p160
    %p167 = scmp.eq.s32.totalorder %s13, 1
    %p168 = por %p166, %p167
    %p169 = scmp.ne.s32.totalorder %s161, %s164
    %p170 = scmp.eq.s32.totalorder %s13, 0
    %p171 = por %p169, %p170
    %p172 = scmp.ne.s32.totalorder %s161, %s164
    %p173 = scmp.eq.s32.totalorder %s18, 1
    %p174 = por %p172, %p173
    %p175 = scmp.ne.s32.totalorder %s164, %s165
    %p176 = scmp.eq.s32.totalorder %s18, 0
    %p177 = por %p175, %p176
    %p178 = scmp.ne.s32.totalorder %s164, %s165
    %p179 = scmp.eq.s32.totalorder %s19, 1
    %p180 = por %p178, %p179
    %p182 = scmp.ne.s32.totalorder %s165, %s181
    %p183 = scmp.eq.s32.totalorder %s19, 0
    %p184 = por %p182, %p183
    %s185 = ssub.s32 %s20, %s32
    %s186 = ssub.s32 %s21, %s28
    %s187 = sor.u32 %s185, %s186
    %p188 = scmp.eq.s32.totalorder %s187, 0
    %s190 = sadd.s32 %s189, 1
    %s191 = scalar_select %p188, %s189, %s190
    %p194 = pneg %p188
    %p195 = scmp.eq.s32.totalorder %s13, 1
    %p196 = por %p194, %p195
    %p197 = scmp.ne.s32.totalorder %s189, %s192
    %p198 = scmp.eq.s32.totalorder %s13, 0
    %p199 = por %p197, %p198
    %p200 = scmp.ne.s32.totalorder %s189, %s192
    %p201 = scmp.eq.s32.totalorder %s18, 1
    %p202 = por %p200, %p201
    %p203 = scmp.ne.s32.totalorder %s192, %s193
    %p204 = scmp.eq.s32.totalorder %s18, 0
    %p205 = por %p203, %p204
    %p206 = scmp.ne.s32.totalorder %s192, %s193
    %p207 = scmp.eq.s32.totalorder %s19, 1
    %p208 = por %p206, %p207
    %p210 = scmp.ne.s32.totalorder %s193, %s209
    %p211 = scmp.eq.s32.totalorder %s19, 0
    %p212 = por %p210, %p211
    %p213 = scmp.le.s32.totalorder 1, %s13
    %p214 = scmp.lt.s32.totalorder %s13, 3
    %p215 = pnand %p213, %p214
    %p216 = pneg %p215
    // Predicated region
    $region9: #{_lambda_.1} parent=5 // pred_check
      _
    $region10: #{_lambda_.1} parent=5 // pred_check_branch
      %218 = sbr.rel (%p215) target = $region12
    $region11: #{_lambda_.1} parent=5 // pred_region
      %s219 = ssub.s32 %s13, 1
      // Predicated region
      $region13: #{_lambda_.1} parent=11 // pred_check
        %p220 = pneg %p102
      $region14: #{_lambda_.1} parent=11 // pred_check_branch
        %222 = sbr.rel (%p220) target = $region16
      $region15: #{_lambda_.1} parent=11 // pred_region
        _
      $region16: #{_lambda_.1} parent=11 // pred_fallthru
        _
      // Predicated region
      $region17: #{_lambda_.1} parent=11 // pred_check
        %p223 = pneg %p123
      $region18: #{_lambda_.1} parent=11 // pred_check_branch
        %225 = sbr.rel (%p223) target = $region20
      $region19: #{_lambda_.1} parent=11 // pred_region
        _
      $region20: #{_lambda_.1} parent=11 // pred_fallthru
        _
      // Predicated region
      $region21: #{_lambda_.1} parent=11 // pred_check
        %p226 = pneg %p149
      $region22: #{_lambda_.1} parent=11 // pred_check_branch
        %228 = sbr.rel (%p226) target = $region24
      $region23: #{_lambda_.1} parent=11 // pred_region
        %s229 = smul.u32 2, %s23
        %p230 = scmp.lt.s32.totalorder %s229, 1
        %s231 = scalar_select %p230, %s229, 1
        %s232 = smul.addr %s231, 8
        %s233 = scalar_lea.vmem %s4, %s232
        %s234 = smul.u32 2, %s23
      $region24: #{_lambda_.1} parent=11 // pred_fallthru
        _
    $region12: #{_lambda_.1} parent=5 // pred_fallthru
      _
    %p235 = scmp.lt.s32.totalorder %s13, 2
    // Predicated region
    $region25: #{_lambda_.1} parent=5 // pred_check
      %p236 = pneg %p235
    $region26: #{_lambda_.1} parent=5 // pred_check_branch
      %238 = sbr.rel (%p236) target = $region28
    $region27: #{_lambda_.1} parent=5 // pred_region
      // Predicated region
      $region29: #{_lambda_.1} parent=27 // pred_check
        %p239 = pneg %p47
      $region30: #{_lambda_.1} parent=27 // pred_check_branch
        %241 = sbr.rel (%p239) target = $region32
      $region31: #{_lambda_.1} parent=27 // pred_region
        %s242 = smul.u32 2, %s21
        %p243 = scmp.lt.s32.totalorder %s20, 1
        %s244 = scalar_select %p243, %s20, 1
        %p245 = scmp.lt.s32.totalorder %s242, 1
        %s246 = scalar_select %p245, %s242, 1
        %s247 = smul.addr %s244, 96
        %s248 = sadd.s32 %s246, %s247
        %s249 = smul.addr %s248, 4
        %s250 = scalar_lea.vmem %s0, %s249
        %s251 = smul.u32 2, %s21
      $region32: #{_lambda_.1} parent=27 // pred_fallthru
        _
      // Predicated region
      $region33: #{_lambda_.1} parent=27 // pred_check
        %p252 = pneg %p75
      $region34: #{_lambda_.1} parent=27 // pred_check_branch
        %254 = sbr.rel (%p252) target = $region36
      $region35: #{_lambda_.1} parent=27 // pred_region
        %s255 = smul.u32 2, %s21
        %p256 = scmp.lt.s32.totalorder %s20, 1
        %s257 = scalar_select %p256, %s20, 1
        %p258 = scmp.lt.s32.totalorder %s255, 1
        %s259 = scalar_select %p258, %s255, 1
        %s260 = smul.addr %s257, 8
        %s261 = sadd.s32 %s259, %s260
        %s262 = smul.addr %s261, 8
        %s263 = scalar_lea.vmem %s1, %s262
        %s264 = smul.u32 2, %s21
      $region36: #{_lambda_.1} parent=27 // pred_fallthru
        _
    $region28: #{_lambda_.1} parent=5 // pred_fallthru
      _
    %p265 = scmp.le.s32.totalorder 1, %s13
    %p266 = scmp.lt.s32.totalorder %s13, 3
    %p267 = pnand %p265, %p266
    %p268 = pneg %p267
    // Predicated region
    $region37: #{_lambda_.1} parent=5 // pred_check
      _
    $region38: #{_lambda_.1} parent=5 // pred_check_branch
      %270 = sbr.rel (%p267) target = $region40
    $region39: #{_lambda_.1} parent=5 // pred_region
      %s271 = ssub.s32 %s13, 1
      %s272 = smul.u32 2, %s23
      %p273 = scmp.lt.s32.totalorder %s22, 1
      %s274 = scalar_select %p273, %s22, 1
      %p275 = scmp.lt.s32.totalorder %s272, 1
      %s276 = scalar_select %p275, %s272, 1
      %s277 = smul.addr %s274, 96
      %s278 = sadd.s32 %s276, %s277
      %s279 = smul.addr %s278, 4
      %s280 = scalar_lea.vmem %s0, %s279
      %p281 = pneg %p53
      %p282 = pneg %p50
      %s283 = smul.u32 2, %s23
      %p284 = scmp.lt.s32.totalorder %s22, 1
      %s285 = scalar_select %p284, %s22, 1
      %p286 = scmp.lt.s32.totalorder %s283, 1
      %s287 = scalar_select %p286, %s283, 1
      %s288 = smul.addr %s285, 8
      %s289 = sadd.s32 %s287, %s288
      %s290 = smul.addr %s289, 8
      %s291 = scalar_lea.vmem %s1, %s290
      %p292 = pneg %p81
      %p293 = pneg %p78
      %p294 = pneg %p102
      %p295 = pneg %p99
      %p296 = pneg %p123
      %p297 = pneg %p120
      %s298 = smul.u32 2, %s23
      %p299 = scmp.lt.s32.totalorder %s298, 1
      %s300 = scalar_select %p299, %s298, 1
      %s301 = smul.addr %s300, 8
      %s302 = scalar_lea.vmem %s4, %s301
      %p303 = pneg %p149
      %p304 = pneg %p146
      %p305 = pneg %p177
      %p306 = pneg %p174
      %s307 = smul.u32 2, %s23
      %p308 = scmp.lt.s32.totalorder %s22, 1
      %s309 = scalar_select %p308, %s22, 1
      %p310 = scmp.lt.s32.totalorder %s307, 1
      %s311 = scalar_select %p310, %s307, 1
      %s312 = smul.addr %s309, 8
      %s313 = sadd.s32 %s311, %s312
      %s314 = smul.addr %s313, 8
      %s315 = scalar_lea.vmem %s5, %s314
      %p316 = pneg %p205
      %p317 = pneg %p202
      %s318 = smul.u32 2, %s23
      %p319 = scmp.lt.s32.totalorder %s22, 1
      %s320 = scalar_select %p319, %s22, 1
      %p321 = scmp.lt.s32.totalorder %s318, 1
      %s322 = scalar_select %p321, %s318, 1
      %s323 = smul.addr %s320, 8
      %s324 = sadd.s32 %s322, %s323
      %s325 = smul.addr %s324, 8
      %s326 = scalar_lea.vmem %s6, %s325
      %s327 = smul.u32 2, %s23
      %p328 = scmp.lt.s32.totalorder %s22, 1
      %s329 = scalar_select %p328, %s22, 1
      %p330 = scmp.lt.s32.totalorder %s327, 1
      %s331 = scalar_select %p330, %s327, 1
      %s332 = smul.addr %s329, 96
      %s333 = sadd.s32 %s331, %s332
      %s334 = smul.addr %s333, 4
      %s335 = scalar_lea.vmem %s0, %s334
      %s336 = smul.u32 2, %s23
      %s337 = smul.u32 2, %s23
      %p338 = scmp.lt.s32.totalorder %s22, 1
      %s339 = scalar_select %p338, %s22, 1
      %p340 = scmp.lt.s32.totalorder %s337, 1
      %s341 = scalar_select %p340, %s337, 1
      %s342 = smul.addr %s339, 8
      %s343 = sadd.s32 %s341, %s342
      %s344 = smul.addr %s343, 8
      %s345 = scalar_lea.vmem %s1, %s344
      %s346 = smul.u32 2, %s23
      %s347 = smul.u32 2, %s23
      %p348 = scmp.lt.s32.totalorder %s347, 1
      %s349 = scalar_select %p348, %s347, 1
      %s350 = smul.addr %s349, 8
      %s351 = scalar_lea.vmem %s4, %s350
      %s352 = smul.u32 2, %s23
      %s353 = smul.u32 2, %s23
      %p354 = scmp.lt.s32.totalorder %s22, 1
      %s355 = scalar_select %p354, %s22, 1
      %p356 = scmp.lt.s32.totalorder %s353, 1
      %s357 = scalar_select %p356, %s353, 1
      %s358 = smul.addr %s355, 8
      %s359 = sadd.s32 %s357, %s358
      %s360 = smul.addr %s359, 8
      %s361 = scalar_lea.vmem %s5, %s360
      %s362 = smul.u32 2, %s23
      %s363 = smul.u32 2, %s23
      %p364 = scmp.lt.s32.totalorder %s22, 1
      %s365 = scalar_select %p364, %s22, 1
      %p366 = scmp.lt.s32.totalorder %s363, 1
      %s367 = scalar_select %p366, %s363, 1
      %s368 = smul.addr %s365, 8
      %s369 = sadd.s32 %s367, %s368
      %s370 = smul.addr %s369, 8
      %s371 = scalar_lea.vmem %s6, %s370
      %s372 = smul.u32 2, %s23
      %v373 = vld [vmem:[%s2] sm:$0xff]
      %v374 = vld [vmem:[%s2 + $0x8] sm:$0xf]
      %v375 = vld [vmem:[%s2 + $0xc] sm:$0xff]
      %v376 = vld [vmem:[%s2 + $0x14] sm:$0xf]
      %v377 = vld [vmem:[%s2 + $0x18] sm:$0xff]
      %v378 = vld [vmem:[%s2 + $0x20] sm:$0xf]
      %v379 = vld [vmem:[%s2 + $0x24] sm:$0xff]
      %v380 = vld [vmem:[%s2 + $0x2c] sm:$0xf]
      %v381 = vld [vmem:[%s2 + $0x30] sm:$0xff]
      %v382 = vld [vmem:[%s2 + $0x38] sm:$0xf]
      %v383 = vld [vmem:[%s2 + $0x3c] sm:$0xff]
      %v384 = vld [vmem:[%s2 + $0x44] sm:$0xf]
      %v385 = vld [vmem:[%s2 + $0x48] sm:$0xff]
      %v386 = vld [vmem:[%s2 + $0x50] sm:$0xf]
      %v387 = vld [vmem:[%s2 + $0x54] sm:$0xff]
      %v388 = vld [vmem:[%s2 + $0x5c] sm:$0xf]
      %v389 = vld [vmem:[%s2 + $0x60] sm:$0xff]
      %v390 = vld [vmem:[%s2 + $0x68] sm:$0xf]
      %v391 = vld [vmem:[%s2 + $0x6c] sm:$0xff]
      %v392 = vld [vmem:[%s2 + $0x74] sm:$0xf]
      %v393 = vld [vmem:[%s2 + $0x78] sm:$0xff]
      %v394 = vld [vmem:[%s2 + $0x80] sm:$0xf]
      %v395 = vld [vmem:[%s2 + $0x84] sm:$0xff]
      %v396 = vld [vmem:[%s2 + $0x8c] sm:$0xf]
      %v397 = vld [vmem:[%s2 + $0x90] sm:$0xff]
      %v398 = vld [vmem:[%s2 + $0x98] sm:$0xf]
      %v399 = vld [vmem:[%s2 + $0x9c] sm:$0xff]
      %v400 = vld [vmem:[%s2 + $0xa4] sm:$0xf]
      %v401 = vld [vmem:[%s2 + $0xa8] sm:$0xff]
      %v402 = vld [vmem:[%s2 + $0xb0] sm:$0xf]
      %v403 = vld [vmem:[%s2 + $0xb4] sm:$0xff]
      %v404 = vld [vmem:[%s2 + $0xbc] sm:$0xf]
      %v405 = vld [vmem:[%s335] sm:$0xff]
      %v406 = vld [vmem:[%s335 + $0x8] sm:$0xff]
      %v407 = vld [vmem:[%s335 + $0x10] sm:$0xff]
      %v408 = vld [vmem:[%s335 + $0x18] sm:$0xff]
      %v409 = vld [vmem:[%s335 + $0x20] sm:$0xff]
      %v410 = vld [vmem:[%s335 + $0x28] sm:$0xff]
      %v411 = vld [vmem:[%s335 + $0x30] sm:$0xff]
      %v412 = vld [vmem:[%s335 + $0x38] sm:$0xff]
      %v413 = vld [vmem:[%s335 + $0x40] sm:$0xff]
      %v414 = vld [vmem:[%s335 + $0x48] sm:$0xff]
      %v415 = vld [vmem:[%s335 + $0x50] sm:$0xff]
      %v416 = vld [vmem:[%s335 + $0x58] sm:$0xff]
      %v417 = vld [vmem:[%s335 + $0x60] sm:$0xff]
      %v418 = vld [vmem:[%s335 + $0x68] sm:$0xff]
      %v419 = vld [vmem:[%s335 + $0x70] sm:$0xff]
      %v420 = vld [vmem:[%s335 + $0x78] sm:$0xff]
      %v421 = vld [vmem:[%s335 + $0x80] sm:$0xff]
      %v422 = vld [vmem:[%s335 + $0x88] sm:$0xff]
      %v423 = vld [vmem:[%s335 + $0x90] sm:$0xff]
      %v424 = vld [vmem:[%s335 + $0x98] sm:$0xff]
      %v425 = vld [vmem:[%s335 + $0xa0] sm:$0xff]
      %v426 = vld [vmem:[%s335 + $0xa8] sm:$0xff]
      %v427 = vld [vmem:[%s335 + $0xb0] sm:$0xff]
      %v428 = vld [vmem:[%s335 + $0xb8] sm:$0xff]
      %v429 = vld [vmem:[%s335 + $0xc0] sm:$0xff]
      %v430 = vld [vmem:[%s335 + $0xc8] sm:$0xff]
      %v431 = vld [vmem:[%s335 + $0xd0] sm:$0xff]
      %v432 = vld [vmem:[%s335 + $0xd8] sm:$0xff]
      %v433 = vld [vmem:[%s335 + $0xe0] sm:$0xff]
      %v434 = vld [vmem:[%s335 + $0xe8] sm:$0xff]
      %v435 = vld [vmem:[%s335 + $0xf0] sm:$0xff]
      %v436 = vld [vmem:[%s335 + $0xf8] sm:$0xff]
      %v437 = vld [vmem:[%s335 + $0x100] sm:$0xff]
      %v438 = vld [vmem:[%s335 + $0x108] sm:$0xff]
      %v439 = vld [vmem:[%s335 + $0x110] sm:$0xff]
      %v440 = vld [vmem:[%s335 + $0x118] sm:$0xff]
      %v441 = vld [vmem:[%s335 + $0x120] sm:$0xff]
      %v442 = vld [vmem:[%s335 + $0x128] sm:$0xff]
      %v443 = vld [vmem:[%s335 + $0x130] sm:$0xff]
      %v444 = vld [vmem:[%s335 + $0x138] sm:$0xff]
      %v445 = vld [vmem:[%s335 + $0x140] sm:$0xff]
      %v446 = vld [vmem:[%s335 + $0x148] sm:$0xff]
      %v447 = vld [vmem:[%s335 + $0x150] sm:$0xff]
      %v448 = vld [vmem:[%s335 + $0x158] sm:$0xff]
      %v449 = vld [vmem:[%s335 + $0x160] sm:$0xff]
      %v450 = vld [vmem:[%s335 + $0x168] sm:$0xff]
      %v451 = vld [vmem:[%s335 + $0x170] sm:$0xff]
      %v452 = vld [vmem:[%s335 + $0x178] sm:$0xff]
      %v453 = vld [vmem:[%s3] sm:$0xff]
      %v454 = vld [vmem:[%s3 + $0x8] sm:$0xff]
      %v455 = vld [vmem:[%s3 + $0x10] sm:$0xff]
      %v456 = vld [vmem:[%s3 + $0x18] sm:$0xff]
      %v457 = vld [vmem:[%s3 + $0x20] sm:$0xff]
      %v458 = vld [vmem:[%s3 + $0x28] sm:$0xff]
      %v459 = vld [vmem:[%s3 + $0x30] sm:$0xff]
      %v460 = vld [vmem:[%s3 + $0x38] sm:$0xff]
      %v461 = vld [vmem:[%s3 + $0x40] sm:$0xff]
      %v462 = vld [vmem:[%s3 + $0x48] sm:$0xff]
      %v463 = vld [vmem:[%s3 + $0x50] sm:$0xff]
      %v464 = vld [vmem:[%s3 + $0x58] sm:$0xff]
      %v465 = vld [vmem:[%s3 + $0x60] sm:$0xff]
      %v466 = vld [vmem:[%s3 + $0x68] sm:$0xff]
      %v467 = vld [vmem:[%s3 + $0x70] sm:$0xff]
      %v468 = vld [vmem:[%s3 + $0x78] sm:$0xff]
      %470 = vset.pattern.permute.xlu0 0
      %471 = vperm.xlu0 %470, %v453
      %v472 = vpop.permute.xlu0 %471
      %475 = vset.pattern.permute.xlu0 0
      %476 = vperm.xlu0 %475, %v454
      %v477 = vpop.permute.xlu0 %476
      %480 = vset.pattern.permute.xlu0 0
      %481 = vperm.xlu0 %480, %v455
      %v482 = vpop.permute.xlu0 %481
      %485 = vset.pattern.permute.xlu0 0
      %486 = vperm.xlu0 %485, %v456
      %v487 = vpop.permute.xlu0 %486
      %490 = vset.pattern.permute.xlu0 0
      %491 = vperm.xlu0 %490, %v457
      %v492 = vpop.permute.xlu0 %491
      %495 = vset.pattern.permute.xlu0 0
      %496 = vperm.xlu0 %495, %v458
      %v497 = vpop.permute.xlu0 %496
      %500 = vset.pattern.permute.xlu0 0
      %501 = vperm.xlu0 %500, %v459
      %v502 = vpop.permute.xlu0 %501
      %505 = vset.pattern.permute.xlu0 0
      %506 = vperm.xlu0 %505, %v460
      %v507 = vpop.permute.xlu0 %506
      %510 = vset.pattern.permute.xlu0 0
      %511 = vperm.xlu0 %510, %v461
      %v512 = vpop.permute.xlu0 %511
      %515 = vset.pattern.permute.xlu0 0
      %516 = vperm.xlu0 %515, %v462
      %v517 = vpop.permute.xlu0 %516
      %520 = vset.pattern.permute.xlu0 0
      %521 = vperm.xlu0 %520, %v463
      %v522 = vpop.permute.xlu0 %521
      %525 = vset.pattern.permute.xlu0 0
      %526 = vperm.xlu0 %525, %v464
      %v527 = vpop.permute.xlu0 %526
      %530 = vset.pattern.permute.xlu0 0
      %531 = vperm.xlu0 %530, %v465
      %v532 = vpop.permute.xlu0 %531
      %535 = vset.pattern.permute.xlu0 0
      %536 = vperm.xlu0 %535, %v466
      %v537 = vpop.permute.xlu0 %536
      %540 = vset.pattern.permute.xlu0 0
      %541 = vperm.xlu0 %540, %v467
      %v542 = vpop.permute.xlu0 %541
      %545 = vset.pattern.permute.xlu0 0
      %546 = vperm.xlu0 %545, %v468
      %v547 = vpop.permute.xlu0 %546
      %v581 = vunpack.c.l.b16 %v373
      %v582 = vunpack.c.h.b16 %v373
      %v583 = vunpack.c.l.b16 %v374
      %v584 = vunpack.c.l.b16 %v375
      %v585 = vunpack.c.h.b16 %v375
      %v586 = vunpack.c.l.b16 %v376
      %v587 = vunpack.c.l.b16 %v377
      %v588 = vunpack.c.h.b16 %v377
      %v589 = vunpack.c.l.b16 %v378
      %v590 = vunpack.c.l.b16 %v379
      %v591 = vunpack.c.h.b16 %v379
      %v592 = vunpack.c.l.b16 %v380
      %v593 = vunpack.c.l.b16 %v381
      %v594 = vunpack.c.h.b16 %v381
      %v595 = vunpack.c.l.b16 %v382
      %v596 = vunpack.c.l.b16 %v383
      %v597 = vunpack.c.h.b16 %v383
      %v598 = vunpack.c.l.b16 %v384
      %v599 = vunpack.c.l.b16 %v385
      %v600 = vunpack.c.h.b16 %v385
      %v601 = vunpack.c.l.b16 %v386
      %v602 = vunpack.c.l.b16 %v387
      %v603 = vunpack.c.h.b16 %v387
      %v604 = vunpack.c.l.b16 %v388
      %v605 = vunpack.c.l.b16 %v389
      %v606 = vunpack.c.h.b16 %v389
      %v607 = vunpack.c.l.b16 %v390
      %v608 = vunpack.c.l.b16 %v391
      %v609 = vunpack.c.h.b16 %v391
      %v610 = vunpack.c.l.b16 %v392
      %v611 = vunpack.c.l.b16 %v393
      %v612 = vunpack.c.h.b16 %v393
      %v613 = vunpack.c.l.b16 %v394
      %v614 = vunpack.c.l.b16 %v395
      %v615 = vunpack.c.h.b16 %v395
      %v616 = vunpack.c.l.b16 %v396
      %v617 = vunpack.c.l.b16 %v397
      %v618 = vunpack.c.h.b16 %v397
      %v619 = vunpack.c.l.b16 %v398
      %v620 = vunpack.c.l.b16 %v399
      %v621 = vunpack.c.h.b16 %v399
      %v622 = vunpack.c.l.b16 %v400
      %v623 = vunpack.c.l.b16 %v401
      %v624 = vunpack.c.h.b16 %v401
      %v625 = vunpack.c.l.b16 %v402
      %v626 = vunpack.c.l.b16 %v403
      %v627 = vunpack.c.h.b16 %v403
      %v628 = vunpack.c.l.b16 %v404
      %v629 = vpack.c.b16 %v584, %v581
      %v630 = vpack.c.b16 %v585, %v582
      %v631 = vpack.c.b16 %v586, %v583
      %v632 = vpack.c.b16 %v590, %v587
      %v633 = vpack.c.b16 %v591, %v588
      %v634 = vpack.c.b16 %v592, %v589
      %v635 = vpack.c.b16 %v596, %v593
      %v636 = vpack.c.b16 %v597, %v594
      %v637 = vpack.c.b16 %v598, %v595
      %v638 = vpack.c.b16 %v602, %v599
      %v639 = vpack.c.b16 %v603, %v600
      %v640 = vpack.c.b16 %v604, %v601
      %v641 = vpack.c.b16 %v608, %v605
      %v642 = vpack.c.b16 %v609, %v606
      %v643 = vpack.c.b16 %v610, %v607
      %v644 = vpack.c.b16 %v614, %v611
      %v645 = vpack.c.b16 %v615, %v612
      %v646 = vpack.c.b16 %v616, %v613
      %v647 = vpack.c.b16 %v620, %v617
      %v648 = vpack.c.b16 %v621, %v618
      %v649 = vpack.c.b16 %v622, %v619
      %v650 = vpack.c.b16 %v626, %v623
      %v651 = vpack.c.b16 %v627, %v624
      %v652 = vpack.c.b16 %v628, %v625
      %v725 = vunpack.c.l.b16 %v405
      %v726 = vunpack.c.h.b16 %v405
      %v727 = vunpack.c.l.b16 %v406
      %v728 = vunpack.c.h.b16 %v406
      %v729 = vunpack.c.l.b16 %v407
      %v730 = vunpack.c.h.b16 %v407
      %v731 = vunpack.c.l.b16 %v408
      %v732 = vunpack.c.h.b16 %v408
      %v733 = vunpack.c.l.b16 %v409
      %v734 = vunpack.c.h.b16 %v409
      %v735 = vunpack.c.l.b16 %v410
      %v736 = vunpack.c.h.b16 %v410
      %v737 = vunpack.c.l.b16 %v411
      %v738 = vunpack.c.h.b16 %v411
      %v739 = vunpack.c.l.b16 %v412
      %v740 = vunpack.c.h.b16 %v412
      %v741 = vunpack.c.l.b16 %v413
      %v742 = vunpack.c.h.b16 %v413
      %v743 = vunpack.c.l.b16 %v414
      %v744 = vunpack.c.h.b16 %v414
      %v745 = vunpack.c.l.b16 %v415
      %v746 = vunpack.c.h.b16 %v415
      %v747 = vunpack.c.l.b16 %v416
      %v748 = vunpack.c.h.b16 %v416
      %v749 = vunpack.c.l.b16 %v417
      %v750 = vunpack.c.h.b16 %v417
      %v751 = vunpack.c.l.b16 %v418
      %v752 = vunpack.c.h.b16 %v418
      %v753 = vunpack.c.l.b16 %v419
      %v754 = vunpack.c.h.b16 %v419
      %v755 = vunpack.c.l.b16 %v420
      %v756 = vunpack.c.h.b16 %v420
      %v757 = vunpack.c.l.b16 %v421
      %v758 = vunpack.c.h.b16 %v421
      %v759 = vunpack.c.l.b16 %v422
      %v760 = vunpack.c.h.b16 %v422
      %v761 = vunpack.c.l.b16 %v423
      %v762 = vunpack.c.h.b16 %v423
      %v763 = vunpack.c.l.b16 %v424
      %v764 = vunpack.c.h.b16 %v424
      %v765 = vunpack.c.l.b16 %v425
      %v766 = vunpack.c.h.b16 %v425
      %v767 = vunpack.c.l.b16 %v426
      %v768 = vunpack.c.h.b16 %v426
      %v769 = vunpack.c.l.b16 %v427
      %v770 = vunpack.c.h.b16 %v427
      %v771 = vunpack.c.l.b16 %v428
      %v772 = vunpack.c.h.b16 %v428
      %v773 = vunpack.c.l.b16 %v429
      %v774 = vunpack.c.h.b16 %v429
      %v775 = vunpack.c.l.b16 %v430
      %v776 = vunpack.c.h.b16 %v430
      %v777 = vunpack.c.l.b16 %v431
      %v778 = vunpack.c.h.b16 %v431
      %v779 = vunpack.c.l.b16 %v432
      %v780 = vunpack.c.h.b16 %v432
      %v781 = vunpack.c.l.b16 %v433
      %v782 = vunpack.c.h.b16 %v433
      %v783 = vunpack.c.l.b16 %v434
      %v784 = vunpack.c.h.b16 %v434
      %v785 = vunpack.c.l.b16 %v435
      %v786 = vunpack.c.h.b16 %v435
      %v787 = vunpack.c.l.b16 %v436
      %v788 = vunpack.c.h.b16 %v436
      %v789 = vunpack.c.l.b16 %v437
      %v790 = vunpack.c.h.b16 %v437
      %v791 = vunpack.c.l.b16 %v438
      %v792 = vunpack.c.h.b16 %v438
      %v793 = vunpack.c.l.b16 %v439
      %v794 = vunpack.c.h.b16 %v439
      %v795 = vunpack.c.l.b16 %v440
      %v796 = vunpack.c.h.b16 %v440
      %v797 = vunpack.c.l.b16 %v441
      %v798 = vunpack.c.h.b16 %v441
      %v799 = vunpack.c.l.b16 %v442
      %v800 = vunpack.c.h.b16 %v442
      %v801 = vunpack.c.l.b16 %v443
      %v802 = vunpack.c.h.b16 %v443
      %v803 = vunpack.c.l.b16 %v444
      %v804 = vunpack.c.h.b16 %v444
      %v805 = vunpack.c.l.b16 %v445
      %v806 = vunpack.c.h.b16 %v445
      %v807 = vunpack.c.l.b16 %v446
      %v808 = vunpack.c.h.b16 %v446
      %v809 = vunpack.c.l.b16 %v447
      %v810 = vunpack.c.h.b16 %v447
      %v811 = vunpack.c.l.b16 %v448
      %v812 = vunpack.c.h.b16 %v448
      %v813 = vunpack.c.l.b16 %v449
      %v814 = vunpack.c.h.b16 %v449
      %v815 = vunpack.c.l.b16 %v450
      %v816 = vunpack.c.h.b16 %v450
      %v817 = vunpack.c.l.b16 %v451
      %v818 = vunpack.c.h.b16 %v451
      %v819 = vunpack.c.l.b16 %v452
      %v820 = vunpack.c.h.b16 %v452
      %v821 = vpack.c.b16 %v727, %v725
      %v822 = vpack.c.b16 %v728, %v726
      %v823 = vpack.c.b16 %v731, %v729
      %v824 = vpack.c.b16 %v732, %v730
      %v825 = vpack.c.b16 %v735, %v733
      %v826 = vpack.c.b16 %v736, %v734
      %v827 = vpack.c.b16 %v739, %v737
      %v828 = vpack.c.b16 %v740, %v738
      %v829 = vpack.c.b16 %v743, %v741
      %v830 = vpack.c.b16 %v744, %v742
      %v831 = vpack.c.b16 %v747, %v745
      %v832 = vpack.c.b16 %v748, %v746
      %v833 = vpack.c.b16 %v751, %v749
      %v834 = vpack.c.b16 %v752, %v750
      %v835 = vpack.c.b16 %v755, %v753
      %v836 = vpack.c.b16 %v756, %v754
      %v837 = vpack.c.b16 %v759, %v757
      %v838 = vpack.c.b16 %v760, %v758
      %v839 = vpack.c.b16 %v763, %v761
      %v840 = vpack.c.b16 %v764, %v762
      %v841 = vpack.c.b16 %v767, %v765
      %v842 = vpack.c.b16 %v768, %v766
      %v843 = vpack.c.b16 %v771, %v769
      %v844 = vpack.c.b16 %v772, %v770
      %v845 = vpack.c.b16 %v775, %v773
      %v846 = vpack.c.b16 %v776, %v774
      %v847 = vpack.c.b16 %v779, %v777
      %v848 = vpack.c.b16 %v780, %v778
      %v849 = vpack.c.b16 %v783, %v781
      %v850 = vpack.c.b16 %v784, %v782
      %v851 = vpack.c.b16 %v787, %v785
      %v852 = vpack.c.b16 %v788, %v786
      %v853 = vpack.c.b16 %v791, %v789
      %v854 = vpack.c.b16 %v792, %v790
      %v855 = vpack.c.b16 %v795, %v793
      %v856 = vpack.c.b16 %v796, %v794
      %v857 = vpack.c.b16 %v799, %v797
      %v858 = vpack.c.b16 %v800, %v798
      %v859 = vpack.c.b16 %v803, %v801
      %v860 = vpack.c.b16 %v804, %v802
      %v861 = vpack.c.b16 %v807, %v805
      %v862 = vpack.c.b16 %v808, %v806
      %v863 = vpack.c.b16 %v811, %v809
      %v864 = vpack.c.b16 %v812, %v810
      %v865 = vpack.c.b16 %v815, %v813
      %v866 = vpack.c.b16 %v816, %v814
      %v867 = vpack.c.b16 %v819, %v817
      %v868 = vpack.c.b16 %v820, %v818
      %917 = vmatpush.bf16.msra.mxu0 %v835
      %918 = vmatpush.bf16.msra.mxu0 %v833
      %919 = vmatpush.bf16.msra.mxu0 %v831
      %920 = vmatpush.bf16.msra.mxu0 %v829
      %921 = vmatpush.bf16.msra.mxu0 %v827
      %922 = vmatpush.bf16.msra.mxu0 %v825
      %923 = vmatpush.bf16.msra.mxu0 %v823
      %924 = vmatpush.bf16.msra.mxu0 %v821
      %925 = vmatmul.bf16.gmra.mxu0 %v629
      %v926 = vpop.f32.mrf.mxu0
      %v927 = vadd.f32 %v472, %v926
      %v928 = vpop.f32.mrf.mxu0
      %v929 = vadd.f32 %v477, %v928
      %930 = vmatmul.bf16.gmra.mxu0 %v632
      %v931 = vpop.f32.mrf.mxu0
      %v932 = vadd.f32 %v482, %v931
      %v933 = vpop.f32.mrf.mxu0
      %v934 = vadd.f32 %v487, %v933
      %935 = vmatmul.bf16.gmra.mxu0 %v635
      %v936 = vpop.f32.mrf.mxu0
      %v937 = vadd.f32 %v492, %v936
      %v938 = vpop.f32.mrf.mxu0
      %v939 = vadd.f32 %v497, %v938
      %940 = vmatmul.bf16.gmra.mxu0 %v638
      %v941 = vpop.f32.mrf.mxu0
      %v942 = vadd.f32 %v502, %v941
      %v943 = vpop.f32.mrf.mxu0
      %v944 = vadd.f32 %v507, %v943
      %945 = vmatmul.bf16.gmra.mxu0 %v641
      %v946 = vpop.f32.mrf.mxu0
      %v947 = vadd.f32 %v512, %v946
      %v948 = vpop.f32.mrf.mxu0
      %v949 = vadd.f32 %v517, %v948
      %950 = vmatmul.bf16.gmra.mxu0 %v644
      %v951 = vpop.f32.mrf.mxu0
      %v952 = vadd.f32 %v522, %v951
      %v953 = vpop.f32.mrf.mxu0
      %v954 = vadd.f32 %v527, %v953
      %955 = vmatmul.bf16.gmra.mxu0 %v647
      %v956 = vpop.f32.mrf.mxu0
      %v957 = vadd.f32 %v532, %v956
      %v958 = vpop.f32.mrf.mxu0
      %v959 = vadd.f32 %v537, %v958
      %960 = vmatmul.bf16.gmra.mxu0 %v650
      %v961 = vpop.f32.mrf.mxu0
      %v962 = vadd.f32 %v542, %v961
      %v963 = vpop.f32.mrf.mxu0
      %v964 = vadd.f32 %v547, %v963
      %965 = vdwg.mxu0
      %966 = vmatpush.bf16.msra.mxu0 %v851
      %967 = vmatpush.bf16.msra.mxu0 %v849
      %968 = vmatpush.bf16.msra.mxu0 %v847
      %969 = vmatpush.bf16.msra.mxu0 %v845
      %970 = vmatpush.bf16.msra.mxu0 %v843
      %971 = vmatpush.bf16.msra.mxu0 %v841
      %972 = vmatpush.bf16.msra.mxu0 %v839
      %973 = vmatpush.bf16.msra.mxu0 %v837
      %974 = vmatmul.bf16.gmra.mxu0 %v630
      %v975 = vpop.f32.mrf.mxu0
      %v976 = vadd.f32 %v927, %v975
      %v977 = vpop.f32.mrf.mxu0
      %v978 = vadd.f32 %v929, %v977
      %979 = vmatmul.bf16.gmra.mxu0 %v633
      %v980 = vpop.f32.mrf.mxu0
      %v981 = vadd.f32 %v932, %v980
      %v982 = vpop.f32.mrf.mxu0
      %v983 = vadd.f32 %v934, %v982
      %984 = vmatmul.bf16.gmra.mxu0 %v636
      %v985 = vpop.f32.mrf.mxu0
      %v986 = vadd.f32 %v937, %v985
      %v987 = vpop.f32.mrf.mxu0
      %v988 = vadd.f32 %v939, %v987
      %989 = vmatmul.bf16.gmra.mxu0 %v639
      %v990 = vpop.f32.mrf.mxu0
      %v991 = vadd.f32 %v942, %v990
      %v992 = vpop.f32.mrf.mxu0
      %v993 = vadd.f32 %v944, %v992
      %994 = vmatmul.bf16.gmra.mxu0 %v642
      %v995 = vpop.f32.mrf.mxu0
      %v996 = vadd.f32 %v947, %v995
      %v997 = vpop.f32.mrf.mxu0
      %v998 = vadd.f32 %v949, %v997
      %999 = vmatmul.bf16.gmra.mxu0 %v645
      %v1000 = vpop.f32.mrf.mxu0
      %v1001 = vadd.f32 %v952, %v1000
      %v1002 = vpop.f32.mrf.mxu0
      %v1003 = vadd.f32 %v954, %v1002
      %1004 = vmatmul.bf16.gmra.mxu0 %v648
      %v1005 = vpop.f32.mrf.mxu0
      %v1006 = vadd.f32 %v957, %v1005
      %v1007 = vpop.f32.mrf.mxu0
      %v1008 = vadd.f32 %v959, %v1007
      %1009 = vmatmul.bf16.gmra.mxu0 %v651
      %v1010 = vpop.f32.mrf.mxu0
      %v1011 = vadd.f32 %v962, %v1010
      %v1012 = vpop.f32.mrf.mxu0
      %v1013 = vadd.f32 %v964, %v1012
      %1014 = vdwg.mxu0
      %1015 = vmatpush.bf16.msra.mxu0 %v867
      %1016 = vmatpush.bf16.msra.mxu0 %v865
      %1017 = vmatpush.bf16.msra.mxu0 %v863
      %1018 = vmatpush.bf16.msra.mxu0 %v861
      %1019 = vmatpush.bf16.msra.mxu0 %v859
      %1020 = vmatpush.bf16.msra.mxu0 %v857
      %1021 = vmatpush.bf16.msra.mxu0 %v855
      %1022 = vmatpush.bf16.msra.mxu0 %v853
      %1023 = vmatmul.bf16.gmra.mxu0 %v631
      %v1024 = vpop.f32.mrf.mxu0
      %v1025 = vadd.f32 %v976, %v1024
      %v1026 = vpop.f32.mrf.mxu0
      %v1027 = vadd.f32 %v978, %v1026
      %1028 = vmatmul.bf16.gmra.mxu0 %v634
      %v1029 = vpop.f32.mrf.mxu0
      %v1030 = vadd.f32 %v981, %v1029
      %v1031 = vpop.f32.mrf.mxu0
      %v1032 = vadd.f32 %v983, %v1031
      %1033 = vmatmul.bf16.gmra.mxu0 %v637
      %v1034 = vpop.f32.mrf.mxu0
      %v1035 = vadd.f32 %v986, %v1034
      %v1036 = vpop.f32.mrf.mxu0
      %v1037 = vadd.f32 %v988, %v1036
      %1038 = vmatmul.bf16.gmra.mxu0 %v640
      %v1039 = vpop.f32.mrf.mxu0
      %v1040 = vadd.f32 %v991, %v1039
      %v1041 = vpop.f32.mrf.mxu0
      %v1042 = vadd.f32 %v993, %v1041
      %1043 = vmatmul.bf16.gmra.mxu0 %v643
      %v1044 = vpop.f32.mrf.mxu0
      %v1045 = vadd.f32 %v996, %v1044
      %v1046 = vpop.f32.mrf.mxu0
      %v1047 = vadd.f32 %v998, %v1046
      %1048 = vmatmul.bf16.gmra.mxu0 %v646
      %v1049 = vpop.f32.mrf.mxu0
      %v1050 = vadd.f32 %v1001, %v1049
      %v1051 = vpop.f32.mrf.mxu0
      %v1052 = vadd.f32 %v1003, %v1051
      %1053 = vmatmul.bf16.gmra.mxu0 %v649
      %v1054 = vpop.f32.mrf.mxu0
      %v1055 = vadd.f32 %v1006, %v1054
      %v1056 = vpop.f32.mrf.mxu0
      %v1057 = vadd.f32 %v1008, %v1056
      %1058 = vmatmul.bf16.gmra.mxu0 %v652
      %v1059 = vpop.f32.mrf.mxu0
      %v1060 = vadd.f32 %v1011, %v1059
      %v1061 = vpop.f32.mrf.mxu0
      %v1062 = vadd.f32 %v1013, %v1061
      %1063 = vdwg.mxu0
      %1064 = vmatpush.bf16.msra.mxu0 %v836
      %1065 = vmatpush.bf16.msra.mxu0 %v834
      %1066 = vmatpush.bf16.msra.mxu0 %v832
      %1067 = vmatpush.bf16.msra.mxu0 %v830
      %1068 = vmatpush.bf16.msra.mxu0 %v828
      %1069 = vmatpush.bf16.msra.mxu0 %v826
      %1070 = vmatpush.bf16.msra.mxu0 %v824
      %1071 = vmatpush.bf16.msra.mxu0 %v822
      %1072 = vmatmul.bf16.gmra.mxu0 %v629
      %v1073 = vpop.f32.mrf.mxu0
      %v1074 = vadd.f32 %v472, %v1073
      %v1075 = vpop.f32.mrf.mxu0
      %v1076 = vadd.f32 %v477, %v1075
      %1077 = vmatmul.bf16.gmra.mxu0 %v632
      %v1078 = vpop.f32.mrf.mxu0
      %v1079 = vadd.f32 %v482, %v1078
      %v1080 = vpop.f32.mrf.mxu0
      %v1081 = vadd.f32 %v487, %v1080
      %1082 = vmatmul.bf16.gmra.mxu0 %v635
      %v1083 = vpop.f32.mrf.mxu0
      %v1084 = vadd.f32 %v492, %v1083
      %v1085 = vpop.f32.mrf.mxu0
      %v1086 = vadd.f32 %v497, %v1085
      %1087 = vmatmul.bf16.gmra.mxu0 %v638
      %v1088 = vpop.f32.mrf.mxu0
      %v1089 = vadd.f32 %v502, %v1088
      %v1090 = vpop.f32.mrf.mxu0
      %v1091 = vadd.f32 %v507, %v1090
      %1092 = vmatmul.bf16.gmra.mxu0 %v641
      %v1093 = vpop.f32.mrf.mxu0
      %v1094 = vadd.f32 %v512, %v1093
      %v1095 = vpop.f32.mrf.mxu0
      %v1096 = vadd.f32 %v517, %v1095
      %1097 = vmatmul.bf16.gmra.mxu0 %v644
      %v1098 = vpop.f32.mrf.mxu0
      %v1099 = vadd.f32 %v522, %v1098
      %v1100 = vpop.f32.mrf.mxu0
      %v1101 = vadd.f32 %v527, %v1100
      %1102 = vmatmul.bf16.gmra.mxu0 %v647
      %v1103 = vpop.f32.mrf.mxu0
      %v1104 = vadd.f32 %v532, %v1103
      %v1105 = vpop.f32.mrf.mxu0
      %v1106 = vadd.f32 %v537, %v1105
      %1107 = vmatmul.bf16.gmra.mxu0 %v650
      %v1108 = vpop.f32.mrf.mxu0
      %v1109 = vadd.f32 %v542, %v1108
      %v1110 = vpop.f32.mrf.mxu0
      %v1111 = vadd.f32 %v547, %v1110
      %1112 = vdwg.mxu0
      %1113 = vmatpush.bf16.msra.mxu0 %v852
      %1114 = vmatpush.bf16.msra.mxu0 %v850
      %1115 = vmatpush.bf16.msra.mxu0 %v848
      %1116 = vmatpush.bf16.msra.mxu0 %v846
      %1117 = vmatpush.bf16.msra.mxu0 %v844
      %1118 = vmatpush.bf16.msra.mxu0 %v842
      %1119 = vmatpush.bf16.msra.mxu0 %v840
      %1120 = vmatpush.bf16.msra.mxu0 %v838
      %1121 = vmatmul.bf16.gmra.mxu0 %v630
      %v1122 = vpop.f32.mrf.mxu0
      %v1123 = vadd.f32 %v1074, %v1122
      %v1124 = vpop.f32.mrf.mxu0
      %v1125 = vadd.f32 %v1076, %v1124
      %1126 = vmatmul.bf16.gmra.mxu0 %v633
      %v1127 = vpop.f32.mrf.mxu0
      %v1128 = vadd.f32 %v1079, %v1127
      %v1129 = vpop.f32.mrf.mxu0
      %v1130 = vadd.f32 %v1081, %v1129
      %1131 = vmatmul.bf16.gmra.mxu0 %v636
      %v1132 = vpop.f32.mrf.mxu0
      %v1133 = vadd.f32 %v1084, %v1132
      %v1134 = vpop.f32.mrf.mxu0
      %v1135 = vadd.f32 %v1086, %v1134
      %1136 = vmatmul.bf16.gmra.mxu0 %v639
      %v1137 = vpop.f32.mrf.mxu0
      %v1138 = vadd.f32 %v1089, %v1137
      %v1139 = vpop.f32.mrf.mxu0
      %v1140 = vadd.f32 %v1091, %v1139
      %1141 = vmatmul.bf16.gmra.mxu0 %v642
      %v1142 = vpop.f32.mrf.mxu0
      %v1143 = vadd.f32 %v1094, %v1142
      %v1144 = vpop.f32.mrf.mxu0
      %v1145 = vadd.f32 %v1096, %v1144
      %1146 = vmatmul.bf16.gmra.mxu0 %v645
      %v1147 = vpop.f32.mrf.mxu0
      %v1148 = vadd.f32 %v1099, %v1147
      %v1149 = vpop.f32.mrf.mxu0
      %v1150 = vadd.f32 %v1101, %v1149
      %1151 = vmatmul.bf16.gmra.mxu0 %v648
      %v1152 = vpop.f32.mrf.mxu0
      %v1153 = vadd.f32 %v1104, %v1152
      %v1154 = vpop.f32.mrf.mxu0
      %v1155 = vadd.f32 %v1106, %v1154
      %1156 = vmatmul.bf16.gmra.mxu0 %v651
      %v1157 = vpop.f32.mrf.mxu0
      %v1158 = vadd.f32 %v1109, %v1157
      %v1159 = vpop.f32.mrf.mxu0
      %v1160 = vadd.f32 %v1111, %v1159
      %1161 = vdwg.mxu0
      %1162 = vmatpush.bf16.msra.mxu0 %v868
      %1163 = vmatpush.bf16.msra.mxu0 %v866
      %1164 = vmatpush.bf16.msra.mxu0 %v864
      %1165 = vmatpush.bf16.msra.mxu0 %v862
      %1166 = vmatpush.bf16.msra.mxu0 %v860
      %1167 = vmatpush.bf16.msra.mxu0 %v858
      %1168 = vmatpush.bf16.msra.mxu0 %v856
      %1169 = vmatpush.bf16.msra.mxu0 %v854
      %1170 = vmatmul.bf16.gmra.mxu0 %v631
      %v1171 = vpop.f32.mrf.mxu0
      %v1172 = vadd.f32 %v1123, %v1171
      %v1173 = vpop.f32.mrf.mxu0
      %v1174 = vadd.f32 %v1125, %v1173
      %1175 = vmatmul.bf16.gmra.mxu0 %v634
      %v1176 = vpop.f32.mrf.mxu0
      %v1177 = vadd.f32 %v1128, %v1176
      %v1178 = vpop.f32.mrf.mxu0
      %v1179 = vadd.f32 %v1130, %v1178
      %1180 = vmatmul.bf16.gmra.mxu0 %v637
      %v1181 = vpop.f32.mrf.mxu0
      %v1182 = vadd.f32 %v1133, %v1181
      %v1183 = vpop.f32.mrf.mxu0
      %v1184 = vadd.f32 %v1135, %v1183
      %1185 = vmatmul.bf16.gmra.mxu0 %v640
      %v1186 = vpop.f32.mrf.mxu0
      %v1187 = vadd.f32 %v1138, %v1186
      %v1188 = vpop.f32.mrf.mxu0
      %v1189 = vadd.f32 %v1140, %v1188
      %1190 = vmatmul.bf16.gmra.mxu0 %v643
      %v1191 = vpop.f32.mrf.mxu0
      %v1192 = vadd.f32 %v1143, %v1191
      %v1193 = vpop.f32.mrf.mxu0
      %v1194 = vadd.f32 %v1145, %v1193
      %1195 = vmatmul.bf16.gmra.mxu0 %v646
      %v1196 = vpop.f32.mrf.mxu0
      %v1197 = vadd.f32 %v1148, %v1196
      %v1198 = vpop.f32.mrf.mxu0
      %v1199 = vadd.f32 %v1150, %v1198
      %1200 = vmatmul.bf16.gmra.mxu0 %v649
      %v1201 = vpop.f32.mrf.mxu0
      %v1202 = vadd.f32 %v1153, %v1201
      %v1203 = vpop.f32.mrf.mxu0
      %v1204 = vadd.f32 %v1155, %v1203
      %1205 = vmatmul.bf16.gmra.mxu0 %v652
      %v1206 = vpop.f32.mrf.mxu0
      %v1207 = vadd.f32 %v1158, %v1206
      %v1208 = vpop.f32.mrf.mxu0
      %v1209 = vadd.f32 %v1160, %v1208
      %1210 = vdwg.mxu0
      %v1211 = vld [vmem:[%s345] sm:$0xff]
      %v1212 = vld [vmem:[%s345 + $0x8] sm:$0xff]
      %v1213 = vld [vmem:[%s345 + $0x10] sm:$0xff]
      %v1214 = vld [vmem:[%s345 + $0x18] sm:$0xff]
      %v1215 = vld [vmem:[%s345 + $0x20] sm:$0xff]
      %v1216 = vld [vmem:[%s345 + $0x28] sm:$0xff]
      %v1217 = vld [vmem:[%s345 + $0x30] sm:$0xff]
      %v1218 = vld [vmem:[%s345 + $0x38] sm:$0xff]
      %v1219 = vld [vmem:[%s351] sm:$0xff]
      %v1220 = vld [vmem:[%s351 + $0x8] sm:$0xff]
      %v1221 = vld [vmem:[%s351 + $0x10] sm:$0xff]
      %v1222 = vld [vmem:[%s351 + $0x18] sm:$0xff]
      %v1223 = vld [vmem:[%s351 + $0x20] sm:$0xff]
      %v1224 = vld [vmem:[%s351 + $0x28] sm:$0xff]
      %v1225 = vld [vmem:[%s351 + $0x30] sm:$0xff]
      %v1226 = vld [vmem:[%s351 + $0x38] sm:$0xff]
      %v1227 = vld [vmem:[%s351 + $0x40] sm:$0xff]
      %v1228 = vld [vmem:[%s351 + $0x48] sm:$0xff]
      %v1229 = vld [vmem:[%s351 + $0x50] sm:$0xff]
      %v1230 = vld [vmem:[%s351 + $0x58] sm:$0xff]
      %v1231 = vld [vmem:[%s351 + $0x60] sm:$0xff]
      %v1232 = vld [vmem:[%s351 + $0x68] sm:$0xff]
      %v1233 = vld [vmem:[%s351 + $0x70] sm:$0xff]
      %v1234 = vld [vmem:[%s351 + $0x78] sm:$0xff]
      %v1235 = vld [vmem:[%s351 + $0x80] sm:$0xff]
      %v1236 = vld [vmem:[%s351 + $0x88] sm:$0xff]
      %v1237 = vld [vmem:[%s351 + $0x90] sm:$0xff]
      %v1238 = vld [vmem:[%s351 + $0x98] sm:$0xff]
      %v1239 = vld [vmem:[%s351 + $0xa0] sm:$0xff]
      %v1240 = vld [vmem:[%s351 + $0xa8] sm:$0xff]
      %v1241 = vld [vmem:[%s351 + $0xb0] sm:$0xff]
      %v1242 = vld [vmem:[%s351 + $0xb8] sm:$0xff]
      %v1243 = vmul.f32 %v1211, %v1219
      %v1244 = vmul.f32 %v1212, %v1220
      %v1245 = vmul.f32 %v1213, %v1221
      %v1246 = vmul.f32 %v1214, %v1222
      %v1247 = vmul.f32 %v1215, %v1223
      %v1248 = vmul.f32 %v1216, %v1224
      %v1249 = vmul.f32 %v1217, %v1225
      %v1250 = vmul.f32 %v1218, %v1226
      %v1251 = vadd.f32 %v1025, %v1243
      %v1252 = vadd.f32 %v1172, %v1244
      %v1253 = vadd.f32 %v1027, %v1245
      %v1254 = vadd.f32 %v1174, %v1246
      %v1255 = vadd.f32 %v1030, %v1247
      %v1256 = vadd.f32 %v1177, %v1248
      %v1257 = vadd.f32 %v1032, %v1249
      %v1258 = vadd.f32 %v1179, %v1250
      %v1259 = vxor.u32 %v1251, 2147483648
      %v1260 = vxor.u32 %v1252, 2147483648
      %v1261 = vxor.u32 %v1253, 2147483648
      %v1262 = vxor.u32 %v1254, 2147483648
      %v1263 = vxor.u32 %v1255, 2147483648
      %v1264 = vxor.u32 %v1256, 2147483648
      %v1265 = vxor.u32 %v1257, 2147483648
      %v1266 = vxor.u32 %v1258, 2147483648
      %v1267 = vmul.f32 %v1259, 1.442695
      %v1268 = vpow.pop %v1267
      %v1269 = vmul.f32 %v1260, 1.442695
      %v1270 = vpow.pop %v1269
      %v1271 = vmul.f32 %v1261, 1.442695
      %v1272 = vpow.pop %v1271
      %v1273 = vmul.f32 %v1262, 1.442695
      %v1274 = vpow.pop %v1273
      %v1275 = vmul.f32 %v1263, 1.442695
      %v1276 = vpow.pop %v1275
      %v1277 = vmul.f32 %v1264, 1.442695
      %v1278 = vpow.pop %v1277
      %v1279 = vmul.f32 %v1265, 1.442695
      %v1280 = vpow.pop %v1279
      %v1281 = vmul.f32 %v1266, 1.442695
      %v1282 = vpow.pop %v1281
      %v1283 = vadd.f32 %v1268, 1.0
      %v1284 = vadd.f32 %v1270, 1.0
      %v1285 = vadd.f32 %v1272, 1.0
      %v1286 = vadd.f32 %v1274, 1.0
      %v1287 = vadd.f32 %v1276, 1.0
      %v1288 = vadd.f32 %v1278, 1.0
      %v1289 = vadd.f32 %v1280, 1.0
      %v1290 = vadd.f32 %v1282, 1.0
      %v1291 = vrcp.pop %v1283
      %v1292 = vmul.f32 %v1283, %v1291
      %v1293 = vsub.f32 1.0, %v1292
      %v1294 = vmul.f32 %v1291, %v1293
      %v1295 = vadd.f32 %v1291, %v1294
      %vm1296 = vweird.f32 %v1283
      %vm1297 = vweird.f32 %v1291
      %vm1298 = vmor %vm1296, %vm1297
      %v1299 = vsel %vm1298, %v1291, %v1295
      %v1300 = vand.u32 2147483647, %v1283
      %vm1301 = vcmp.eq.f32.partialorder %v1300, 8.507059e+37
      %v1302 = vand.u32 %v1283, 2147483648
      %v1303 = vor.u32 1.1754944e-38, %v1302
      %v1304 = vsel %vm1301, %v1303, %v1299
      %v1305 = vmul.f32 1.0, %v1304
      %v1306 = vrcp.pop %v1284
      %v1307 = vmul.f32 %v1284, %v1306
      %v1308 = vsub.f32 1.0, %v1307
      %v1309 = vmul.f32 %v1306, %v1308
      %v1310 = vadd.f32 %v1306, %v1309
      %vm1311 = vweird.f32 %v1284
      %vm1312 = vweird.f32 %v1306
      %vm1313 = vmor %vm1311, %vm1312
      %v1314 = vsel %vm1313, %v1306, %v1310
      %v1315 = vand.u32 2147483647, %v1284
      %vm1316 = vcmp.eq.f32.partialorder %v1315, 8.507059e+37
      %v1317 = vand.u32 %v1284, 2147483648
      %v1318 = vor.u32 1.1754944e-38, %v1317
      %v1319 = vsel %vm1316, %v1318, %v1314
      %v1320 = vmul.f32 1.0, %v1319
      %v1321 = vrcp.pop %v1285
      %v1322 = vmul.f32 %v1285, %v1321
      %v1323 = vsub.f32 1.0, %v1322
      %v1324 = vmul.f32 %v1321, %v1323
      %v1325 = vadd.f32 %v1321, %v1324
      %vm1326 = vweird.f32 %v1285
      %vm1327 = vweird.f32 %v1321
      %vm1328 = vmor %vm1326, %vm1327
      %v1329 = vsel %vm1328, %v1321, %v1325
      %v1330 = vand.u32 2147483647, %v1285
      %vm1331 = vcmp.eq.f32.partialorder %v1330, 8.507059e+37
      %v1332 = vand.u32 %v1285, 2147483648
      %v1333 = vor.u32 1.1754944e-38, %v1332
      %v1334 = vsel %vm1331, %v1333, %v1329
      %v1335 = vmul.f32 1.0, %v1334
      %v1336 = vrcp.pop %v1286
      %v1337 = vmul.f32 %v1286, %v1336
      %v1338 = vsub.f32 1.0, %v1337
      %v1339 = vmul.f32 %v1336, %v1338
      %v1340 = vadd.f32 %v1336, %v1339
      %vm1341 = vweird.f32 %v1286
      %vm1342 = vweird.f32 %v1336
      %vm1343 = vmor %vm1341, %vm1342
      %v1344 = vsel %vm1343, %v1336, %v1340
      %v1345 = vand.u32 2147483647, %v1286
      %vm1346 = vcmp.eq.f32.partialorder %v1345, 8.507059e+37
      %v1347 = vand.u32 %v1286, 2147483648
      %v1348 = vor.u32 1.1754944e-38, %v1347
      %v1349 = vsel %vm1346, %v1348, %v1344
      %v1350 = vmul.f32 1.0, %v1349
      %v1351 = vrcp.pop %v1287
      %v1352 = vmul.f32 %v1287, %v1351
      %v1353 = vsub.f32 1.0, %v1352
      %v1354 = vmul.f32 %v1351, %v1353
      %v1355 = vadd.f32 %v1351, %v1354
      %vm1356 = vweird.f32 %v1287
      %vm1357 = vweird.f32 %v1351
      %vm1358 = vmor %vm1356, %vm1357
      %v1359 = vsel %vm1358, %v1351, %v1355
      %v1360 = vand.u32 2147483647, %v1287
      %vm1361 = vcmp.eq.f32.partialorder %v1360, 8.507059e+37
      %v1362 = vand.u32 %v1287, 2147483648
      %v1363 = vor.u32 1.1754944e-38, %v1362
      %v1364 = vsel %vm1361, %v1363, %v1359
      %v1365 = vmul.f32 1.0, %v1364
      %v1366 = vrcp.pop %v1288
      %v1367 = vmul.f32 %v1288, %v1366
      %v1368 = vsub.f32 1.0, %v1367
      %v1369 = vmul.f32 %v1366, %v1368
      %v1370 = vadd.f32 %v1366, %v1369
      %vm1371 = vweird.f32 %v1288
      %vm1372 = vweird.f32 %v1366
      %vm1373 = vmor %vm1371, %vm1372
      %v1374 = vsel %vm1373, %v1366, %v1370
      %v1375 = vand.u32 2147483647, %v1288
      %vm1376 = vcmp.eq.f32.partialorder %v1375, 8.507059e+37
      %v1377 = vand.u32 %v1288, 2147483648
      %v1378 = vor.u32 1.1754944e-38, %v1377
      %v1379 = vsel %vm1376, %v1378, %v1374
      %v1380 = vmul.f32 1.0, %v1379
      %v1381 = vrcp.pop %v1289
      %v1382 = vmul.f32 %v1289, %v1381
      %v1383 = vsub.f32 1.0, %v1382
      %v1384 = vmul.f32 %v1381, %v1383
      %v1385 = vadd.f32 %v1381, %v1384
      %vm1386 = vweird.f32 %v1289
      %vm1387 = vweird.f32 %v1381
      %vm1388 = vmor %vm1386, %vm1387
      %v1389 = vsel %vm1388, %v1381, %v1385
      %v1390 = vand.u32 2147483647, %v1289
      %vm1391 = vcmp.eq.f32.partialorder %v1390, 8.507059e+37
      %v1392 = vand.u32 %v1289, 2147483648
      %v1393 = vor.u32 1.1754944e-38, %v1392
      %v1394 = vsel %vm1391, %v1393, %v1389
      %v1395 = vmul.f32 1.0, %v1394
      %v1396 = vrcp.pop %v1290
      %v1397 = vmul.f32 %v1290, %v1396
      %v1398 = vsub.f32 1.0, %v1397
      %v1399 = vmul.f32 %v1396, %v1398
      %v1400 = vadd.f32 %v1396, %v1399
      %vm1401 = vweird.f32 %v1290
      %vm1402 = vweird.f32 %v1396
      %vm1403 = vmor %vm1401, %vm1402
      %v1404 = vsel %vm1403, %v1396, %v1400
      %v1405 = vand.u32 2147483647, %v1290
      %vm1406 = vcmp.eq.f32.partialorder %v1405, 8.507059e+37
      %v1407 = vand.u32 %v1290, 2147483648
      %v1408 = vor.u32 1.1754944e-38, %v1407
      %v1409 = vsel %vm1406, %v1408, %v1404
      %v1410 = vmul.f32 1.0, %v1409
      %v1411 = vmul.f32 %v1211, %v1227
      %v1412 = vmul.f32 %v1212, %v1228
      %v1413 = vmul.f32 %v1213, %v1229
      %v1414 = vmul.f32 %v1214, %v1230
      %v1415 = vmul.f32 %v1215, %v1231
      %v1416 = vmul.f32 %v1216, %v1232
      %v1417 = vmul.f32 %v1217, %v1233
      %v1418 = vmul.f32 %v1218, %v1234
      %v1419 = vadd.f32 %v1035, %v1411
      %v1420 = vadd.f32 %v1182, %v1412
      %v1421 = vadd.f32 %v1037, %v1413
      %v1422 = vadd.f32 %v1184, %v1414
      %v1423 = vadd.f32 %v1040, %v1415
      %v1424 = vadd.f32 %v1187, %v1416
      %v1425 = vadd.f32 %v1042, %v1417
      %v1426 = vadd.f32 %v1189, %v1418
      %v1427 = vxor.u32 %v1419, 2147483648
      %v1428 = vxor.u32 %v1420, 2147483648
      %v1429 = vxor.u32 %v1421, 2147483648
      %v1430 = vxor.u32 %v1422, 2147483648
      %v1431 = vxor.u32 %v1423, 2147483648
      %v1432 = vxor.u32 %v1424, 2147483648
      %v1433 = vxor.u32 %v1425, 2147483648
      %v1434 = vxor.u32 %v1426, 2147483648
      %v1435 = vmul.f32 %v1427, 1.442695
      %v1436 = vpow.pop %v1435
      %v1437 = vmul.f32 %v1428, 1.442695
      %v1438 = vpow.pop %v1437
      %v1439 = vmul.f32 %v1429, 1.442695
      %v1440 = vpow.pop %v1439
      %v1441 = vmul.f32 %v1430, 1.442695
      %v1442 = vpow.pop %v1441
      %v1443 = vmul.f32 %v1431, 1.442695
      %v1444 = vpow.pop %v1443
      %v1445 = vmul.f32 %v1432, 1.442695
      %v1446 = vpow.pop %v1445
      %v1447 = vmul.f32 %v1433, 1.442695
      %v1448 = vpow.pop %v1447
      %v1449 = vmul.f32 %v1434, 1.442695
      %v1450 = vpow.pop %v1449
      %v1451 = vadd.f32 %v1436, 1.0
      %v1452 = vadd.f32 %v1438, 1.0
      %v1453 = vadd.f32 %v1440, 1.0
      %v1454 = vadd.f32 %v1442, 1.0
      %v1455 = vadd.f32 %v1444, 1.0
      %v1456 = vadd.f32 %v1446, 1.0
      %v1457 = vadd.f32 %v1448, 1.0
      %v1458 = vadd.f32 %v1450, 1.0
      %v1459 = vrcp.pop %v1451
      %v1460 = vmul.f32 %v1451, %v1459
      %v1461 = vsub.f32 1.0, %v1460
      %v1462 = vmul.f32 %v1459, %v1461
      %v1463 = vadd.f32 %v1459, %v1462
      %vm1464 = vweird.f32 %v1451
      %vm1465 = vweird.f32 %v1459
      %vm1466 = vmor %vm1464, %vm1465
      %v1467 = vsel %vm1466, %v1459, %v1463
      %v1468 = vand.u32 2147483647, %v1451
      %vm1469 = vcmp.eq.f32.partialorder %v1468, 8.507059e+37
      %v1470 = vand.u32 %v1451, 2147483648
      %v1471 = vor.u32 1.1754944e-38, %v1470
      %v1472 = vsel %vm1469, %v1471, %v1467
      %v1473 = vmul.f32 1.0, %v1472
      %v1474 = vrcp.pop %v1452
      %v1475 = vmul.f32 %v1452, %v1474
      %v1476 = vsub.f32 1.0, %v1475
      %v1477 = vmul.f32 %v1474, %v1476
      %v1478 = vadd.f32 %v1474, %v1477
      %vm1479 = vweird.f32 %v1452
      %vm1480 = vweird.f32 %v1474
      %vm1481 = vmor %vm1479, %vm1480
      %v1482 = vsel %vm1481, %v1474, %v1478
      %v1483 = vand.u32 2147483647, %v1452
      %vm1484 = vcmp.eq.f32.partialorder %v1483, 8.507059e+37
      %v1485 = vand.u32 %v1452, 2147483648
      %v1486 = vor.u32 1.1754944e-38, %v1485
      %v1487 = vsel %vm1484, %v1486, %v1482
      %v1488 = vmul.f32 1.0, %v1487
      %v1489 = vrcp.pop %v1453
      %v1490 = vmul.f32 %v1453, %v1489
      %v1491 = vsub.f32 1.0, %v1490
      %v1492 = vmul.f32 %v1489, %v1491
      %v1493 = vadd.f32 %v1489, %v1492
      %vm1494 = vweird.f32 %v1453
      %vm1495 = vweird.f32 %v1489
      %vm1496 = vmor %vm1494, %vm1495
      %v1497 = vsel %vm1496, %v1489, %v1493
      %v1498 = vand.u32 2147483647, %v1453
      %vm1499 = vcmp.eq.f32.partialorder %v1498, 8.507059e+37
      %v1500 = vand.u32 %v1453, 2147483648
      %v1501 = vor.u32 1.1754944e-38, %v1500
      %v1502 = vsel %vm1499, %v1501, %v1497
      %v1503 = vmul.f32 1.0, %v1502
      %v1504 = vrcp.pop %v1454
      %v1505 = vmul.f32 %v1454, %v1504
      %v1506 = vsub.f32 1.0, %v1505
      %v1507 = vmul.f32 %v1504, %v1506
      %v1508 = vadd.f32 %v1504, %v1507
      %vm1509 = vweird.f32 %v1454
      %vm1510 = vweird.f32 %v1504
      %vm1511 = vmor %vm1509, %vm1510
      %v1512 = vsel %vm1511, %v1504, %v1508
      %v1513 = vand.u32 2147483647, %v1454
      %vm1514 = vcmp.eq.f32.partialorder %v1513, 8.507059e+37
      %v1515 = vand.u32 %v1454, 2147483648
      %v1516 = vor.u32 1.1754944e-38, %v1515
      %v1517 = vsel %vm1514, %v1516, %v1512
      %v1518 = vmul.f32 1.0, %v1517
      %v1519 = vrcp.pop %v1455
      %v1520 = vmul.f32 %v1455, %v1519
      %v1521 = vsub.f32 1.0, %v1520
      %v1522 = vmul.f32 %v1519, %v1521
      %v1523 = vadd.f32 %v1519, %v1522
      %vm1524 = vweird.f32 %v1455
      %vm1525 = vweird.f32 %v1519
      %vm1526 = vmor %vm1524, %vm1525
      %v1527 = vsel %vm1526, %v1519, %v1523
      %v1528 = vand.u32 2147483647, %v1455
      %vm1529 = vcmp.eq.f32.partialorder %v1528, 8.507059e+37
      %v1530 = vand.u32 %v1455, 2147483648
      %v1531 = vor.u32 1.1754944e-38, %v1530
      %v1532 = vsel %vm1529, %v1531, %v1527
      %v1533 = vmul.f32 1.0, %v1532
      %v1534 = vrcp.pop %v1456
      %v1535 = vmul.f32 %v1456, %v1534
      %v1536 = vsub.f32 1.0, %v1535
      %v1537 = vmul.f32 %v1534, %v1536
      %v1538 = vadd.f32 %v1534, %v1537
      %vm1539 = vweird.f32 %v1456
      %vm1540 = vweird.f32 %v1534
      %vm1541 = vmor %vm1539, %vm1540
      %v1542 = vsel %vm1541, %v1534, %v1538
      %v1543 = vand.u32 2147483647, %v1456
      %vm1544 = vcmp.eq.f32.partialorder %v1543, 8.507059e+37
      %v1545 = vand.u32 %v1456, 2147483648
      %v1546 = vor.u32 1.1754944e-38, %v1545
      %v1547 = vsel %vm1544, %v1546, %v1542
      %v1548 = vmul.f32 1.0, %v1547
      %v1549 = vrcp.pop %v1457
      %v1550 = vmul.f32 %v1457, %v1549
      %v1551 = vsub.f32 1.0, %v1550
      %v1552 = vmul.f32 %v1549, %v1551
      %v1553 = vadd.f32 %v1549, %v1552
      %vm1554 = vweird.f32 %v1457
      %vm1555 = vweird.f32 %v1549
      %vm1556 = vmor %vm1554, %vm1555
      %v1557 = vsel %vm1556, %v1549, %v1553
      %v1558 = vand.u32 2147483647, %v1457
      %vm1559 = vcmp.eq.f32.partialorder %v1558, 8.507059e+37
      %v1560 = vand.u32 %v1457, 2147483648
      %v1561 = vor.u32 1.1754944e-38, %v1560
      %v1562 = vsel %vm1559, %v1561, %v1557
      %v1563 = vmul.f32 1.0, %v1562
      %v1564 = vrcp.pop %v1458
      %v1565 = vmul.f32 %v1458, %v1564
      %v1566 = vsub.f32 1.0, %v1565
      %v1567 = vmul.f32 %v1564, %v1566
      %v1568 = vadd.f32 %v1564, %v1567
      %vm1569 = vweird.f32 %v1458
      %vm1570 = vweird.f32 %v1564
      %vm1571 = vmor %vm1569, %vm1570
      %v1572 = vsel %vm1571, %v1564, %v1568
      %v1573 = vand.u32 2147483647, %v1458
      %vm1574 = vcmp.eq.f32.partialorder %v1573, 8.507059e+37
      %v1575 = vand.u32 %v1458, 2147483648
      %v1576 = vor.u32 1.1754944e-38, %v1575
      %v1577 = vsel %vm1574, %v1576, %v1572
      %v1578 = vmul.f32 1.0, %v1577
      %v1579 = vmul.f32 %v1473, %v1211
      %v1580 = vmul.f32 %v1488, %v1212
      %v1581 = vmul.f32 %v1503, %v1213
      %v1582 = vmul.f32 %v1518, %v1214
      %v1583 = vmul.f32 %v1533, %v1215
      %v1584 = vmul.f32 %v1548, %v1216
      %v1585 = vmul.f32 %v1563, %v1217
      %v1586 = vmul.f32 %v1578, %v1218
      %v1587 = vtanh.pop %v1045
      %v1588 = vtanh.pop %v1192
      %v1589 = vtanh.pop %v1047
      %v1590 = vtanh.pop %v1194
      %v1591 = vtanh.pop %v1050
      %v1592 = vtanh.pop %v1197
      %v1593 = vtanh.pop %v1052
      %v1594 = vtanh.pop %v1199
      %v1595 = vmul.f32 %v1305, %v1587
      %v1596 = vmul.f32 %v1320, %v1588
      %v1597 = vmul.f32 %v1335, %v1589
      %v1598 = vmul.f32 %v1350, %v1590
      %v1599 = vmul.f32 %v1365, %v1591
      %v1600 = vmul.f32 %v1380, %v1592
      %v1601 = vmul.f32 %v1395, %v1593
      %v1602 = vmul.f32 %v1410, %v1594
      %v1603 = vadd.f32 %v1579, %v1595
      %v1604 = vadd.f32 %v1580, %v1596
      %v1605 = vadd.f32 %v1581, %v1597
      %v1606 = vadd.f32 %v1582, %v1598
      %v1607 = vadd.f32 %v1583, %v1599
      %v1608 = vadd.f32 %v1584, %v1600
      %v1609 = vadd.f32 %v1585, %v1601
      %v1610 = vadd.f32 %v1586, %v1602
      %v1611 = vmul.f32 %v1603, %v1235
      %v1612 = vmul.f32 %v1604, %v1236
      %v1613 = vmul.f32 %v1605, %v1237
      %v1614 = vmul.f32 %v1606, %v1238
      %v1615 = vmul.f32 %v1607, %v1239
      %v1616 = vmul.f32 %v1608, %v1240
      %v1617 = vmul.f32 %v1609, %v1241
      %v1618 = vmul.f32 %v1610, %v1242
      %v1619 = vadd.f32 %v1055, %v1611
      %v1620 = vadd.f32 %v1202, %v1612
      %v1621 = vadd.f32 %v1057, %v1613
      %v1622 = vadd.f32 %v1204, %v1614
      %v1623 = vadd.f32 %v1060, %v1615
      %v1624 = vadd.f32 %v1207, %v1616
      %v1625 = vadd.f32 %v1062, %v1617
      %v1626 = vadd.f32 %v1209, %v1618
      %v1627 = vxor.u32 %v1619, 2147483648
      %v1628 = vxor.u32 %v1620, 2147483648
      %v1629 = vxor.u32 %v1621, 2147483648
      %v1630 = vxor.u32 %v1622, 2147483648
      %v1631 = vxor.u32 %v1623, 2147483648
      %v1632 = vxor.u32 %v1624, 2147483648
      %v1633 = vxor.u32 %v1625, 2147483648
      %v1634 = vxor.u32 %v1626, 2147483648
      %v1635 = vmul.f32 %v1627, 1.442695
      %v1636 = vpow.pop %v1635
      %v1637 = vmul.f32 %v1628, 1.442695
      %v1638 = vpow.pop %v1637
      %v1639 = vmul.f32 %v1629, 1.442695
      %v1640 = vpow.pop %v1639
      %v1641 = vmul.f32 %v1630, 1.442695
      %v1642 = vpow.pop %v1641
      %v1643 = vmul.f32 %v1631, 1.442695
      %v1644 = vpow.pop %v1643
      %v1645 = vmul.f32 %v1632, 1.442695
      %v1646 = vpow.pop %v1645
      %v1647 = vmul.f32 %v1633, 1.442695
      %v1648 = vpow.pop %v1647
      %v1649 = vmul.f32 %v1634, 1.442695
      %v1650 = vpow.pop %v1649
      %v1651 = vadd.f32 %v1636, 1.0
      %v1652 = vadd.f32 %v1638, 1.0
      %v1653 = vadd.f32 %v1640, 1.0
      %v1654 = vadd.f32 %v1642, 1.0
      %v1655 = vadd.f32 %v1644, 1.0
      %v1656 = vadd.f32 %v1646, 1.0
      %v1657 = vadd.f32 %v1648, 1.0
      %v1658 = vadd.f32 %v1650, 1.0
      %v1659 = vrcp.pop %v1651
      %v1660 = vmul.f32 %v1651, %v1659
      %v1661 = vsub.f32 1.0, %v1660
      %v1662 = vmul.f32 %v1659, %v1661
      %v1663 = vadd.f32 %v1659, %v1662
      %vm1664 = vweird.f32 %v1651
      %vm1665 = vweird.f32 %v1659
      %vm1666 = vmor %vm1664, %vm1665
      %v1667 = vsel %vm1666, %v1659, %v1663
      %v1668 = vand.u32 2147483647, %v1651
      %vm1669 = vcmp.eq.f32.partialorder %v1668, 8.507059e+37
      %v1670 = vand.u32 %v1651, 2147483648
      %v1671 = vor.u32 1.1754944e-38, %v1670
      %v1672 = vsel %vm1669, %v1671, %v1667
      %v1673 = vmul.f32 1.0, %v1672
      %v1674 = vrcp.pop %v1652
      %v1675 = vmul.f32 %v1652, %v1674
      %v1676 = vsub.f32 1.0, %v1675
      %v1677 = vmul.f32 %v1674, %v1676
      %v1678 = vadd.f32 %v1674, %v1677
      %vm1679 = vweird.f32 %v1652
      %vm1680 = vweird.f32 %v1674
      %vm1681 = vmor %vm1679, %vm1680
      %v1682 = vsel %vm1681, %v1674, %v1678
      %v1683 = vand.u32 2147483647, %v1652
      %vm1684 = vcmp.eq.f32.partialorder %v1683, 8.507059e+37
      %v1685 = vand.u32 %v1652, 2147483648
      %v1686 = vor.u32 1.1754944e-38, %v1685
      %v1687 = vsel %vm1684, %v1686, %v1682
      %v1688 = vmul.f32 1.0, %v1687
      %v1689 = vrcp.pop %v1653
      %v1690 = vmul.f32 %v1653, %v1689
      %v1691 = vsub.f32 1.0, %v1690
      %v1692 = vmul.f32 %v1689, %v1691
      %v1693 = vadd.f32 %v1689, %v1692
      %vm1694 = vweird.f32 %v1653
      %vm1695 = vweird.f32 %v1689
      %vm1696 = vmor %vm1694, %vm1695
      %v1697 = vsel %vm1696, %v1689, %v1693
      %v1698 = vand.u32 2147483647, %v1653
      %vm1699 = vcmp.eq.f32.partialorder %v1698, 8.507059e+37
      %v1700 = vand.u32 %v1653, 2147483648
      %v1701 = vor.u32 1.1754944e-38, %v1700
      %v1702 = vsel %vm1699, %v1701, %v1697
      %v1703 = vmul.f32 1.0, %v1702
      %v1704 = vrcp.pop %v1654
      %v1705 = vmul.f32 %v1654, %v1704
      %v1706 = vsub.f32 1.0, %v1705
      %v1707 = vmul.f32 %v1704, %v1706
      %v1708 = vadd.f32 %v1704, %v1707
      %vm1709 = vweird.f32 %v1654
      %vm1710 = vweird.f32 %v1704
      %vm1711 = vmor %vm1709, %vm1710
      %v1712 = vsel %vm1711, %v1704, %v1708
      %v1713 = vand.u32 2147483647, %v1654
      %vm1714 = vcmp.eq.f32.partialorder %v1713, 8.507059e+37
      %v1715 = vand.u32 %v1654, 2147483648
      %v1716 = vor.u32 1.1754944e-38, %v1715
      %v1717 = vsel %vm1714, %v1716, %v1712
      %v1718 = vmul.f32 1.0, %v1717
      %v1719 = vrcp.pop %v1655
      %v1720 = vmul.f32 %v1655, %v1719
      %v1721 = vsub.f32 1.0, %v1720
      %v1722 = vmul.f32 %v1719, %v1721
      %v1723 = vadd.f32 %v1719, %v1722
      %vm1724 = vweird.f32 %v1655
      %vm1725 = vweird.f32 %v1719
      %vm1726 = vmor %vm1724, %vm1725
      %v1727 = vsel %vm1726, %v1719, %v1723
      %v1728 = vand.u32 2147483647, %v1655
      %vm1729 = vcmp.eq.f32.partialorder %v1728, 8.507059e+37
      %v1730 = vand.u32 %v1655, 2147483648
      %v1731 = vor.u32 1.1754944e-38, %v1730
      %v1732 = vsel %vm1729, %v1731, %v1727
      %v1733 = vmul.f32 1.0, %v1732
      %v1734 = vrcp.pop %v1656
      %v1735 = vmul.f32 %v1656, %v1734
      %v1736 = vsub.f32 1.0, %v1735
      %v1737 = vmul.f32 %v1734, %v1736
      %v1738 = vadd.f32 %v1734, %v1737
      %vm1739 = vweird.f32 %v1656
      %vm1740 = vweird.f32 %v1734
      %vm1741 = vmor %vm1739, %vm1740
      %v1742 = vsel %vm1741, %v1734, %v1738
      %v1743 = vand.u32 2147483647, %v1656
      %vm1744 = vcmp.eq.f32.partialorder %v1743, 8.507059e+37
      %v1745 = vand.u32 %v1656, 2147483648
      %v1746 = vor.u32 1.1754944e-38, %v1745
      %v1747 = vsel %vm1744, %v1746, %v1742
      %v1748 = vmul.f32 1.0, %v1747
      %v1749 = vrcp.pop %v1657
      %v1750 = vmul.f32 %v1657, %v1749
      %v1751 = vsub.f32 1.0, %v1750
      %v1752 = vmul.f32 %v1749, %v1751
      %v1753 = vadd.f32 %v1749, %v1752
      %vm1754 = vweird.f32 %v1657
      %vm1755 = vweird.f32 %v1749
      %vm1756 = vmor %vm1754, %vm1755
      %v1757 = vsel %vm1756, %v1749, %v1753
      %v1758 = vand.u32 2147483647, %v1657
      %vm1759 = vcmp.eq.f32.partialorder %v1758, 8.507059e+37
      %v1760 = vand.u32 %v1657, 2147483648
      %v1761 = vor.u32 1.1754944e-38, %v1760
      %v1762 = vsel %vm1759, %v1761, %v1757
      %v1763 = vmul.f32 1.0, %v1762
      %v1764 = vrcp.pop %v1658
      %v1765 = vmul.f32 %v1658, %v1764
      %v1766 = vsub.f32 1.0, %v1765
      %v1767 = vmul.f32 %v1764, %v1766
      %v1768 = vadd.f32 %v1764, %v1767
      %vm1769 = vweird.f32 %v1658
      %vm1770 = vweird.f32 %v1764
      %vm1771 = vmor %vm1769, %vm1770
      %v1772 = vsel %vm1771, %v1764, %v1768
      %v1773 = vand.u32 2147483647, %v1658
      %vm1774 = vcmp.eq.f32.partialorder %v1773, 8.507059e+37
      %v1775 = vand.u32 %v1658, 2147483648
      %v1776 = vor.u32 1.1754944e-38, %v1775
      %v1777 = vsel %vm1774, %v1776, %v1772
      %v1778 = vmul.f32 1.0, %v1777
      %v1779 = vtanh.pop %v1603
      %v1780 = vtanh.pop %v1604
      %v1781 = vtanh.pop %v1605
      %v1782 = vtanh.pop %v1606
      %v1783 = vtanh.pop %v1607
      %v1784 = vtanh.pop %v1608
      %v1785 = vtanh.pop %v1609
      %v1786 = vtanh.pop %v1610
      %v1787 = vmul.f32 %v1673, %v1779
      %v1788 = vmul.f32 %v1688, %v1780
      %v1789 = vmul.f32 %v1703, %v1781
      %v1790 = vmul.f32 %v1718, %v1782
      %v1791 = vmul.f32 %v1733, %v1783
      %v1792 = vmul.f32 %v1748, %v1784
      %v1793 = vmul.f32 %v1763, %v1785
      %v1794 = vmul.f32 %v1778, %v1786
      %1795 = vst [vmem:[%s361] sm:$0xff] %v1787
      %1796 = vst [vmem:[%s361 + $0x8] sm:$0xff] %v1788
      %1797 = vst [vmem:[%s361 + $0x10] sm:$0xff] %v1789
      %1798 = vst [vmem:[%s361 + $0x18] sm:$0xff] %v1790
      %1799 = vst [vmem:[%s361 + $0x20] sm:$0xff] %v1791
      %1800 = vst [vmem:[%s361 + $0x28] sm:$0xff] %v1792
      %1801 = vst [vmem:[%s361 + $0x30] sm:$0xff] %v1793
      %1802 = vst [vmem:[%s361 + $0x38] sm:$0xff] %v1794
      %1803 = vst [vmem:[%s371] sm:$0xff] %v1603
      %1804 = vst [vmem:[%s371 + $0x8] sm:$0xff] %v1604
      %1805 = vst [vmem:[%s371 + $0x10] sm:$0xff] %v1605
      %1806 = vst [vmem:[%s371 + $0x18] sm:$0xff] %v1606
      %1807 = vst [vmem:[%s371 + $0x20] sm:$0xff] %v1607
      %1808 = vst [vmem:[%s371 + $0x28] sm:$0xff] %v1608
      %1809 = vst [vmem:[%s371 + $0x30] sm:$0xff] %v1609
      %1810 = vst [vmem:[%s371 + $0x38] sm:$0xff] %v1610
      %s1811 = smul.u32 2, %s23
      %p1812 = scmp.lt.s32.totalorder %s22, 1
      %s1813 = scalar_select %p1812, %s22, 1
      %p1814 = scmp.lt.s32.totalorder %s1811, 1
      %s1815 = scalar_select %p1814, %s1811, 1
      %s1816 = smul.addr %s1813, 8
      %s1817 = sadd.s32 %s1815, %s1816
      %s1818 = smul.addr %s1817, 8
      %s1819 = scalar_lea.vmem %s5, %s1818
      %s1820 = smul.u32 2, %s23
      %p1821 = scmp.lt.s32.totalorder %s22, 1
      %s1822 = scalar_select %p1821, %s22, 1
      %p1823 = scmp.lt.s32.totalorder %s1820, 1
      %s1824 = scalar_select %p1823, %s1820, 1
      %s1825 = smul.addr %s1822, 8
      %s1826 = sadd.s32 %s1824, %s1825
      %s1827 = smul.addr %s1826, 8
      %s1828 = scalar_lea.vmem %s6, %s1827
      // Predicated region
      $region41: #{_lambda_.1} parent=39 // pred_check
        %p1829 = pneg %p174
      $region42: #{_lambda_.1} parent=39 // pred_check_branch
        %1831 = sbr.rel (%p1829) target = $region44
      $region43: #{_lambda_.1} parent=39 // pred_region
        %s1832 = smul.u32 2, %s23
      $region44: #{_lambda_.1} parent=39 // pred_fallthru
        _
      // Predicated region
      $region45: #{_lambda_.1} parent=39 // pred_check
        %p1833 = pneg %p202
      $region46: #{_lambda_.1} parent=39 // pred_check_branch
        %1835 = sbr.rel (%p1833) target = $region48
      $region47: #{_lambda_.1} parent=39 // pred_region
        %s1836 = smul.u32 2, %s23
      $region48: #{_lambda_.1} parent=39 // pred_fallthru
        _
    $region40: #{_lambda_.1} parent=5 // pred_fallthru
      _
    %p1837 = scmp.le.s32.totalorder 2, %s13
    // Predicated region
    $region49: #{_lambda_.1} parent=5 // pred_check
      %p1838 = pneg %p1837
    $region50: #{_lambda_.1} parent=5 // pred_check_branch
      %1840 = sbr.rel (%p1838) target = $region52
    $region51: #{_lambda_.1} parent=5 // pred_region
      %s1841 = ssub.s32 %s13, 2
      // Predicated region
      $region53: #{_lambda_.1} parent=51 // pred_check
        %p1842 = pneg %p180
      $region54: #{_lambda_.1} parent=51 // pred_check_branch
        %1844 = sbr.rel (%p1842) target = $region56
      $region55: #{_lambda_.1} parent=51 // pred_region
        %s1845 = smul.u32 2, %s25
        %p1846 = scmp.lt.s32.totalorder %s24, 1
        %s1847 = scalar_select %p1846, %s24, 1
        %p1848 = scmp.lt.s32.totalorder %s1845, 1
        %s1849 = scalar_select %p1848, %s1845, 1
        %s1850 = smul.addr %s1847, 8
        %s1851 = sadd.s32 %s1849, %s1850
        %s1852 = smul.addr %s1851, 8
        %s1853 = scalar_lea.vmem %s5, %s1852
      $region56: #{_lambda_.1} parent=51 // pred_fallthru
        _
      // Predicated region
      $region57: #{_lambda_.1} parent=51 // pred_check
        %p1854 = pneg %p208
      $region58: #{_lambda_.1} parent=51 // pred_check_branch
        %1856 = sbr.rel (%p1854) target = $region60
      $region59: #{_lambda_.1} parent=51 // pred_region
        %s1857 = smul.u32 2, %s25
        %p1858 = scmp.lt.s32.totalorder %s24, 1
        %s1859 = scalar_select %p1858, %s24, 1
        %p1860 = scmp.lt.s32.totalorder %s1857, 1
        %s1861 = scalar_select %p1860, %s1857, 1
        %s1862 = smul.addr %s1859, 8
        %s1863 = sadd.s32 %s1861, %s1862
        %s1864 = smul.addr %s1863, 8
        %s1865 = scalar_lea.vmem %s6, %s1864
      $region60: #{_lambda_.1} parent=51 // pred_fallthru
        _
    $region52: #{_lambda_.1} parent=5 // pred_fallthru
      _
  $region6: #{_lambda_.1} parent=0 // loop_footer
    %s17 = sadd.s32 1, %s13
  $region7: #{_lambda_.1} parent=0 // loop_footer_branch
    %12 = sbr.rel target = $region3
  $region8: #{_lambda_.1} parent=0 // loop_exit
    _

</llo_original>
